<compile_context>
chip_gen: v7x
topology: tpu7x:2x2x1
jax: 0.10.0
libtpu: 0.0.40
codegen_flags: <defaults>
</compile_context>

<pallas_src>
import functools

import jax
import jax.numpy as jnp
import numpy as np
from jax import lax
from jax.experimental import pallas as pl
from jax.experimental.pallas import tpu as pltpu

KSIZE = 3
PAD = 1
BN_EPS = 1e-5

# Explicit scoped-VMEM ceiling: below v7x's 64 MiB physical VMEM, above the
# 16/32 MiB defaults on v5e/v6e, leaving headroom for double-buffering.
VMEM_LIMIT_BYTES = 48 * 1024 * 1024


# ---------------------------------------------------------------------------
# Kernel A: 3x3 same-padding conv (stride 1) + fused partial BN stats.
# ---------------------------------------------------------------------------
def _conv3x3_bn_stats_kernel(x_ref, w_ref, b_ref, y_ref, stats_ref):
    # x_ref:     (1, H, W, Cin)   unpadded input image (padding built here)
    # w_ref:     (9*Cin, Cout)    im2col weight matrix (compute dtype)
    # b_ref:     (1, Cout)        conv bias (f32)
    # y_ref:     (1, H*W, Cout)   conv output (compute dtype, lane-dense slab)
    # stats_ref: (1, 2, Cout)     [sum(y), sum(y*y)] over this image (f32)
    _, H, W, Cin = x_ref.shape
    Cout = y_ref.shape[-1]

    # In-kernel zero padding: avoids a second full copy of x in HBM (jnp.pad).
    x0 = x_ref[0]
    zc = jnp.zeros((H, PAD, Cin), x0.dtype)
    zr = jnp.zeros((PAD, W + 2 * PAD, Cin), x0.dtype)
    slab = jnp.concatenate(
        [zr, jnp.concatenate([zc, x0, zc], axis=1), zr], axis=0)  # (H+2, W+2, Cin)

    # im2col: 9 shifted windows concatenated on the lane (channel) axis, flattened
    # once -> a single MXU matmul with K = 9*Cin (amortizes MXU push/pop 9x).
    taps = []
    for kh in range(KSIZE):
        for kw in range(KSIZE):
            taps.append(slab[kh:kh + H, kw:kw + W, :])
    patch = jnp.concatenate(taps, axis=-1).reshape(H * W, KSIZE * KSIZE * Cin)

    acc = jnp.dot(patch.astype(w_ref.dtype), w_ref[...],
                  preferred_element_type=jnp.float32)          # (H*W, Cout) f32
    acc = acc + b_ref[...]

    # Fused per-channel partial batch-norm statistics (f32 accumulation).
    col_sum = jnp.sum(acc, axis=0, keepdims=True)              # (1, Cout)
    col_sqr = jnp.sum(acc * acc, axis=0, keepdims=True)        # (1, Cout)
    stats_ref[...] = jnp.concatenate([col_sum, col_sqr], axis=0).reshape(1, 2, Cout)

    y_ref[...] = acc.reshape(1, H * W, Cout).astype(y_ref.dtype)


def conv3x3_bn_stats(x_nhwc, w_mat, bias, compute_dtype):
    """x_nhwc: (N,H,W,Cin) f32; w_mat: (9*Cin,Cout); bias: (Cout,).

    Returns (y_flat, stats): y_flat (N, H*W, Cout) in compute_dtype,
    stats (N, 2, Cout) f32 with per-image [sum, sum-of-squares] per channel.
    """
    N, H, W, Cin = x_nhwc.shape
    Cout = w_mat.shape[-1]
    # TODO(synk): for very large H*W (one image + im2col patch no longer fits VMEM,
    # e.g. 512x512x64), add a row-block grid axis with a 1-row halo.
    return pl.pallas_call(
        _conv3x3_bn_stats_kernel,
        out_shape=(
            jax.ShapeDtypeStruct((N, H * W, Cout), compute_dtype),
            jax.ShapeDtypeStruct((N, 2, Cout), jnp.float32),
        ),
        grid=(N,),
        in_specs=[
            pl.BlockSpec((1, H, W, Cin), lambda n: (n, 0, 0, 0)),
            pl.BlockSpec((KSIZE * KSIZE * Cin, Cout), lambda n: (0, 0)),
            pl.BlockSpec((1, Cout), lambda n: (0, 0)),
        ],
        out_specs=(
            pl.BlockSpec((1, H * W, Cout), lambda n: (n, 0, 0)),
            pl.BlockSpec((1, 2, Cout), lambda n: (n, 0, 0)),
        ),
        compiler_params=pltpu.CompilerParams(
            dimension_semantics=("parallel",),
            vmem_limit_bytes=VMEM_LIMIT_BYTES),
    )(x_nhwc, w_mat.astype(compute_dtype),
      bias.reshape(1, Cout).astype(jnp.float32))


# ---------------------------------------------------------------------------
# Kernel B: apply precomputed BN scale/shift + ReLU (tiled, fully parallel).
# ---------------------------------------------------------------------------
def _bn_relu_kernel(y_ref, scale_ref, shift_ref, o_ref):
    y = y_ref[...].astype(jnp.float32)
    o_ref[...] = jnp.maximum(y * scale_ref[...] + shift_ref[...], 0.0).astype(o_ref.dtype)


def _pick_spatial_block(L, C, elem_bytes, budget_bytes=4 * 1024 * 1024):
    """Largest block of the flattened-spatial axis that divides L, is a multiple
    of 8 sublanes (or the full axis), and keeps one block under budget."""
    if L * C * elem_bytes <= budget_bytes:
        return L
    target = max(8, budget_bytes // max(1, C * elem_bytes))
    for cand in range(min(L, target), 7, -1):
        if L % cand == 0 and cand % 8 == 0:
            return cand
    return L


def bn_relu_apply(y_flat, scale, shift):
    """y_flat: (N, L, C); scale/shift: (C,). Returns f32 (N, L, C)."""
    N, L, C = y_flat.shape
    tl = _pick_spatial_block(L, C, y_flat.dtype.itemsize)
    return pl.pallas_call(
        _bn_relu_kernel,
        out_shape=jax.ShapeDtypeStruct((N, L, C), jnp.float32),
        grid=(N, L // tl),
        in_specs=[
            pl.BlockSpec((1, tl, C), lambda n, l: (n, l, 0)),
            pl.BlockSpec((1, 1, C), lambda n, l: (0, 0, 0)),
            pl.BlockSpec((1, 1, C), lambda n, l: (0, 0, 0)),
        ],
        out_specs=pl.BlockSpec((1, tl, C), lambda n, l: (n, l, 0)),
        compiler_params=pltpu.CompilerParams(
            dimension_semantics=("parallel", "parallel"),
            vmem_limit_bytes=VMEM_LIMIT_BYTES),
    )(y_flat, scale.reshape(1, 1, C).astype(jnp.float32),
      shift.reshape(1, 1, C).astype(jnp.float32))


# ---------------------------------------------------------------------------
# Parameter init (deterministic, mirrors the module's reset_parameters scales).
# ---------------------------------------------------------------------------
def init_unetconv2_params(key, input_dim, output_dim, n=1):
    params = []
    cin = input_dim
    for _ in range(n):
        key, kw, kb, kg = jax.random.split(key, 4)
        fan_in = cin * KSIZE * KSIZE
        # kaiming_normal_(a=0, mode='fan_in') -> std = sqrt(2 / fan_in)
        w = jax.random.normal(kw, (output_dim, cin, KSIZE, KSIZE),
                              jnp.float32) * jnp.sqrt(2.0 / fan_in)
        # Conv bias keeps PyTorch default: U(-1/sqrt(fan_in), 1/sqrt(fan_in))
        bound = 1.0 / np.sqrt(fan_in)
        b = jax.random.uniform(kb, (output_dim,), jnp.float32, -bound, bound)
        gamma = 1.0 + 0.02 * jax.random.normal(kg, (output_dim,), jnp.float32)
        beta = jnp.zeros((output_dim,), jnp.float32)
        # Pre-arrange conv weight (O, I, kh, kw) -> (kh, kw, I, O) -> (9*I, O)
        # so the kernel does a single im2col matmul.
        w_mat = jnp.transpose(w, (2, 3, 1, 0)).reshape(KSIZE * KSIZE * cin, output_dim)
        params.append(dict(w_mat=w_mat, w_oihw=w, b=b, gamma=gamma, beta=beta))
        cin = output_dim
    return params


# ---------------------------------------------------------------------------
# Forward passes.
# ---------------------------------------------------------------------------
def _unetconv2_nhwc(x_nhwc, params, compute_dtype):
    x = x_nhwc.astype(jnp.float32)
    for p in params:
        N, H, W, _ = x.shape
        y_flat, stats = conv3x3_bn_stats(x, p["w_mat"], p["b"], compute_dtype)
        cnt = float(N * H * W)
        mean = jnp.sum(stats[:, 0, :], axis=0) / cnt
        var = jnp.maximum(jnp.sum(stats[:, 1, :], axis=0) / cnt - mean * mean, 0.0)
        inv_std = lax.rsqrt(var + BN_EPS)
        scale = p["gamma"] * inv_std
        shift = p["beta"] - mean * scale
        out_flat = bn_relu_apply(y_flat, scale, shift)
        x = out_flat.reshape(N, H, W, -1)   # layout-free reshape (same memory order)
    return x


@functools.partial(jax.jit, static_argnames=("compute_dtype",))
def unetconv2_forward_nhwc(x_nhwc, params, compute_dtype=jnp.float32):
    """NHWC-native forward: no layout changes inside (preferred entry point)."""
    return _unetconv2_nhwc(x_nhwc, params, compute_dtype)


@functools.partial(jax.jit, static_argnames=("compute_dtype",))
def unetconv2_forward(x_nchw, params, compute_dtype=jnp.float32):
    """PyTorch-style NCHW interface (single transpose in, single transpose out)."""
    x = jnp.transpose(x_nchw, (0, 2, 3, 1))
    y = _unetconv2_nhwc(x, params, compute_dtype)
    return jnp.transpose(y, (0, 3, 1, 2))


# ---------------------------------------------------------------------------
# Pure-JAX reference for validation.
# ---------------------------------------------------------------------------
def unetconv2_reference(x_nchw, params):
    x = x_nchw.astype(jnp.float32)
    for p in params:
        y = lax.conv_general_dilated(
            x, p["w_oihw"], window_strides=(1, 1),
            padding=((PAD, PAD), (PAD, PAD)),
            dimension_numbers=("NCHW", "OIHW", "NCHW"))
        y = y + p["b"].reshape(1, -1, 1, 1)
        mean = jnp.mean(y, axis=(0, 2, 3), keepdims=True)
        var = jnp.mean(jnp.square(y - mean), axis=(0, 2, 3), keepdims=True)  # biased
        y = (y - mean) * lax.rsqrt(var + BN_EPS)
        y = y * p["gamma"].reshape(1, -1, 1, 1) + p["beta"].reshape(1, -1, 1, 1)
        x = jnp.maximum(y, 0.0)
    return x


if __name__ == "__main__":
    key = jax.random.PRNGKey(0)
    k_x, k_p = jax.random.split(key)

    N, Cin, H, W = 2, 4, 16, 16
    Cout = 8
    x_nchw = jax.random.normal(k_x, (N, Cin, H, W), jnp.float32)
    params = init_unetconv2_params(k_p, Cin, Cout, n=1)

    ref_nchw = np.asarray(jax.block_until_ready(unetconv2_reference(x_nchw, params)))
    ref_nhwc = np.transpose(ref_nchw, (0, 2, 3, 1))

    # NHWC-native path (layout change done once, outside the kernels).
    x_nhwc = jnp.transpose(x_nchw, (0, 2, 3, 1))

    # f32 MXU path (tight tolerance).
    out_f32 = jax.block_until_ready(
        unetconv2_forward_nhwc(x_nhwc, params, compute_dtype=jnp.float32))
    assert out_f32.shape == (N, H, W, Cout), out_f32.shape
    np.testing.assert_allclose(np.asarray(out_f32), ref_nhwc, rtol=1e-4, atol=1e-4)

    # bf16 MXU path (bf16 matmul operands + bf16 intermediate y, f32 stats/accum).
    out_bf16 = jax.block_until_ready(
        unetconv2_forward_nhwc(x_nhwc, params, compute_dtype=jnp.bfloat16))
    np.testing.assert_allclose(np.asarray(out_bf16), ref_nhwc, rtol=5e-2, atol=5e-2)

    # PyTorch-style NCHW wrapper.
    out_nchw = jax.block_until_ready(
        unetconv2_forward(x_nchw, params, compute_dtype=jnp.float32))
    assert out_nchw.shape == (N, Cout, H, W), out_nchw.shape
    np.testing.assert_allclose(np.asarray(out_nchw), ref_nchw, rtol=1e-4, atol=1e-4)

    print("KERNEL_OK")
</pallas_src>

<mosaic_0001>
module attributes {stable_mosaic.version = 11 : i64} {
  func.func @_conv3x3_bn_stats_kernel(%arg0: i32, %arg1: memref<1x16x16x4xf32, #tpu.memory_space<vmem>>, %arg2: memref<36x8xf32, #tpu.memory_space<vmem>>, %arg3: memref<1x8xf32, #tpu.memory_space<vmem>>, %arg4: memref<1x256x8xf32, #tpu.memory_space<vmem>>, %arg5: memref<1x2x8xf32, #tpu.memory_space<vmem>>) attributes {dimension_semantics = [#tpu.dimension_semantics<parallel>], iteration_bounds = array<i64: 2>, scalar_prefetch = 0 : i64, scratch_operands = 0 : i64, tpu.core_type = #tpu.core_type<tc>, window_params = [{transform_indices = @transform_0, window_bounds = array<i64: 1, 16, 16, 4>}, {pipeline_mode = #tpu.pipeline_mode<synchronous>, transform_indices = @transform_1, window_bounds = array<i64: 36, 8>}, {pipeline_mode = #tpu.pipeline_mode<synchronous>, transform_indices = @transform_2, window_bounds = array<i64: 1, 8>}, {transform_indices = @transform_3, window_bounds = array<i64: 1, 256, 8>}, {transform_indices = @transform_4, window_bounds = array<i64: 1, 2, 8>}]} {
    %c0 = arith.constant 0 : index
    %c0_0 = arith.constant 0 : index
    %c0_1 = arith.constant 0 : index
    %c0_2 = arith.constant 0 : index
    %0 = vector.load %arg1[%c0, %c0_0, %c0_1, %c0_2] : memref<1x16x16x4xf32, #tpu.memory_space<vmem>>, vector<1x16x16x4xf32>
    %1 = vector.shape_cast %0 : vector<1x16x16x4xf32> to vector<16x16x4xf32>
    %cst = arith.constant 0.000000e+00 : f32
    %2 = vector.broadcast %cst : f32 to vector<16x1x4xf32>
    %cst_3 = arith.constant 0.000000e+00 : f32
    %3 = vector.broadcast %cst_3 : f32 to vector<1x18x4xf32>
    %4 = tpu.concatenate %2, %1, %2 in 1 : vector<16x1x4xf32>, vector<16x16x4xf32>, vector<16x1x4xf32> -> vector<16x18x4xf32>
    %5 = tpu.concatenate %3, %4, %3 in 0 : vector<1x18x4xf32>, vector<16x18x4xf32>, vector<1x18x4xf32> -> vector<18x18x4xf32>
    %6 = vector.extract_strided_slice %5 {offsets = [0, 0, 0], sizes = [16, 16, 4], strides = [1, 1, 1]} : vector<18x18x4xf32> to vector<16x16x4xf32>
    %7 = vector.extract_strided_slice %5 {offsets = [0, 1, 0], sizes = [16, 16, 4], strides = [1, 1, 1]} : vector<18x18x4xf32> to vector<16x16x4xf32>
    %8 = vector.extract_strided_slice %5 {offsets = [0, 2, 0], sizes = [16, 16, 4], strides = [1, 1, 1]} : vector<18x18x4xf32> to vector<16x16x4xf32>
    %9 = vector.extract_strided_slice %5 {offsets = [1, 0, 0], sizes = [16, 16, 4], strides = [1, 1, 1]} : vector<18x18x4xf32> to vector<16x16x4xf32>
    %10 = vector.extract_strided_slice %5 {offsets = [1, 1, 0], sizes = [16, 16, 4], strides = [1, 1, 1]} : vector<18x18x4xf32> to vector<16x16x4xf32>
    %11 = vector.extract_strided_slice %5 {offsets = [1, 2, 0], sizes = [16, 16, 4], strides = [1, 1, 1]} : vector<18x18x4xf32> to vector<16x16x4xf32>
    %12 = vector.extract_strided_slice %5 {offsets = [2, 0, 0], sizes = [16, 16, 4], strides = [1, 1, 1]} : vector<18x18x4xf32> to vector<16x16x4xf32>
    %13 = vector.extract_strided_slice %5 {offsets = [2, 1, 0], sizes = [16, 16, 4], strides = [1, 1, 1]} : vector<18x18x4xf32> to vector<16x16x4xf32>
    %14 = vector.extract_strided_slice %5 {offsets = [2, 2, 0], sizes = [16, 16, 4], strides = [1, 1, 1]} : vector<18x18x4xf32> to vector<16x16x4xf32>
    %15 = tpu.concatenate %6, %7, %8, %9, %10, %11, %12, %13, %14 in 2 : vector<16x16x4xf32>, vector<16x16x4xf32>, vector<16x16x4xf32>, vector<16x16x4xf32>, vector<16x16x4xf32>, vector<16x16x4xf32>, vector<16x16x4xf32>, vector<16x16x4xf32>, vector<16x16x4xf32> -> vector<16x16x36xf32>
    %16 = vector.shape_cast %15 : vector<16x16x36xf32> to vector<256x36xf32>
    %c0_4 = arith.constant 0 : index
    %c0_5 = arith.constant 0 : index
    %17 = vector.load %arg2[%c0_4, %c0_5] : memref<36x8xf32, #tpu.memory_space<vmem>>, vector<36x8xf32>
    %cst_6 = arith.constant dense<0.000000e+00> : vector<256x8xf32>
    %18 = tpu.matmul %16, %17, %cst_6 {dimension_numbers = #tpu.dot_dimension_numbers<[1], [0], [0], [1], [0, 0, 1, 1], [], []>} : vector<256x36xf32>, vector<36x8xf32>, vector<256x8xf32> -> vector<256x8xf32>
    %c0_7 = arith.constant 0 : index
    %c0_8 = arith.constant 0 : index
    %19 = vector.load %arg3[%c0_7, %c0_8] : memref<1x8xf32, #tpu.memory_space<vmem>>, vector<1x8xf32>
    %20 = vector.broadcast %19 : vector<1x8xf32> to vector<256x8xf32>
    %21 = arith.addf %18, %20 : vector<256x8xf32>
    %cst_9 = arith.constant dense<0.000000e+00> : vector<8xf32>
    %22 = vector.multi_reduction <add>, %21, %cst_9 [0] : vector<256x8xf32> to vector<8xf32>
    %23 = vector.shape_cast %22 : vector<8xf32> to vector<1x8xf32>
    %24 = arith.mulf %21, %21 : vector<256x8xf32>
    %cst_10 = arith.constant dense<0.000000e+00> : vector<8xf32>
    %25 = vector.multi_reduction <add>, %24, %cst_10 [0] : vector<256x8xf32> to vector<8xf32>
    %26 = vector.shape_cast %25 : vector<8xf32> to vector<1x8xf32>
    %27 = tpu.concatenate %23, %26 in 0 : vector<1x8xf32>, vector<1x8xf32> -> vector<2x8xf32>
    %28 = vector.shape_cast %27 : vector<2x8xf32> to vector<1x2x8xf32>
    %c0_11 = arith.constant 0 : index
    %c0_12 = arith.constant 0 : index
    %c0_13 = arith.constant 0 : index
    %29 = vector.load %arg5[%c0_11, %c0_12, %c0_13] : memref<1x2x8xf32, #tpu.memory_space<vmem>>, vector<1x2x8xf32>
    tpu.vector_store %arg5[%c0_11, %c0_12, %c0_13], %28 {strides = array<i32>} : memref<1x2x8xf32, #tpu.memory_space<vmem>>, vector<1x2x8xf32>,
    %30 = vector.shape_cast %21 : vector<256x8xf32> to vector<1x256x8xf32>
    %c0_14 = arith.constant 0 : index
    %c0_15 = arith.constant 0 : index
    %c0_16 = arith.constant 0 : index
    %31 = vector.load %arg4[%c0_14, %c0_15, %c0_16] : memref<1x256x8xf32, #tpu.memory_space<vmem>>, vector<1x256x8xf32>
    tpu.vector_store %arg4[%c0_14, %c0_15, %c0_16], %30 {strides = array<i32>} : memref<1x256x8xf32, #tpu.memory_space<vmem>>, vector<1x256x8xf32>,
    return
  }
  func.func @transform_0(%arg0: i32) -> (i32, i32, i32, i32) {
    %c0_i32 = arith.constant 0 : i32
    %c0_i32_0 = arith.constant 0 : i32
    %c0_i32_1 = arith.constant 0 : i32
    %c0_i32_2 = arith.constant 0 : i32
    return %arg0, %c0_i32, %c0_i32_0, %c0_i32_1 : i32, i32, i32, i32
  }
  func.func @transform_1(%arg0: i32) -> (i32, i32) {
    %c0_i32 = arith.constant 0 : i32
    %c0_i32_0 = arith.constant 0 : i32
    %c0_i32_1 = arith.constant 0 : i32
    return %c0_i32, %c0_i32_0 : i32, i32
  }
  func.func @transform_2(%arg0: i32) -> (i32, i32) {
    %c0_i32 = arith.constant 0 : i32
    %c0_i32_0 = arith.constant 0 : i32
    %c0_i32_1 = arith.constant 0 : i32
    return %c0_i32, %c0_i32_0 : i32, i32
  }
  func.func @transform_3(%arg0: i32) -> (i32, i32, i32) {
    %c0_i32 = arith.constant 0 : i32
    %c0_i32_0 = arith.constant 0 : i32
    %c0_i32_1 = arith.constant 0 : i32
    return %arg0, %c0_i32, %c0_i32_0 : i32, i32, i32
  }
  func.func @transform_4(%arg0: i32) -> (i32, i32, i32) {
    %c0_i32 = arith.constant 0 : i32
    %c0_i32_0 = arith.constant 0 : i32
    %c0_i32_1 = arith.constant 0 : i32
    return %arg0, %c0_i32, %c0_i32_0 : i32, i32, i32
  }
}

module attributes {stable_mosaic.version = 11 : i64} {
  func.func @_bn_relu_kernel(%arg0: i32, %arg1: i32, %arg2: memref<1x256x8xf32, #tpu.memory_space<vmem>>, %arg3: memref<1x1x8xf32, #tpu.memory_space<vmem>>, %arg4: memref<1x1x8xf32, #tpu.memory_space<vmem>>, %arg5: memref<1x256x8xf32, #tpu.memory_space<vmem>>) attributes {dimension_semantics = [#tpu.dimension_semantics<parallel>, #tpu.dimension_semantics<parallel>], iteration_bounds = array<i64: 2, 1>, scalar_prefetch = 0 : i64, scratch_operands = 0 : i64, tpu.core_type = #tpu.core_type<tc>, window_params = [{transform_indices = @transform_0, window_bounds = array<i64: 1, 256, 8>}, {pipeline_mode = #tpu.pipeline_mode<synchronous>, transform_indices = @transform_1, window_bounds = array<i64: 1, 1, 8>}, {pipeline_mode = #tpu.pipeline_mode<synchronous>, transform_indices = @transform_2, window_bounds = array<i64: 1, 1, 8>}, {transform_indices = @transform_3, window_bounds = array<i64: 1, 256, 8>}]} {
    %c0 = arith.constant 0 : index
    %c0_0 = arith.constant 0 : index
    %c0_1 = arith.constant 0 : index
    %0 = vector.load %arg2[%c0, %c0_0, %c0_1] : memref<1x256x8xf32, #tpu.memory_space<vmem>>, vector<1x256x8xf32>
    %c0_2 = arith.constant 0 : index
    %c0_3 = arith.constant 0 : index
    %c0_4 = arith.constant 0 : index
    %1 = vector.load %arg3[%c0_2, %c0_3, %c0_4] : memref<1x1x8xf32, #tpu.memory_space<vmem>>, vector<1x1x8xf32>
    %2 = vector.broadcast %1 : vector<1x1x8xf32> to vector<1x256x8xf32>
    %3 = arith.mulf %0, %2 : vector<1x256x8xf32>
    %c0_5 = arith.constant 0 : index
    %c0_6 = arith.constant 0 : index
    %c0_7 = arith.constant 0 : index
    %4 = vector.load %arg4[%c0_5, %c0_6, %c0_7] : memref<1x1x8xf32, #tpu.memory_space<vmem>>, vector<1x1x8xf32>
    %5 = vector.broadcast %4 : vector<1x1x8xf32> to vector<1x256x8xf32>
    %6 = arith.addf %3, %5 : vector<1x256x8xf32>
    %cst = arith.constant 0.000000e+00 : f32
    %7 = vector.broadcast %cst : f32 to vector<1x256x8xf32>
    %8 = arith.maximumf %6, %7 : vector<1x256x8xf32>
    %c0_8 = arith.constant 0 : index
    %c0_9 = arith.constant 0 : index
    %c0_10 = arith.constant 0 : index
    %9 = vector.load %arg5[%c0_8, %c0_9, %c0_10] : memref<1x256x8xf32, #tpu.memory_space<vmem>>, vector<1x256x8xf32>
    tpu.vector_store %arg5[%c0_8, %c0_9, %c0_10], %8 {strides = array<i32>} : memref<1x256x8xf32, #tpu.memory_space<vmem>>, vector<1x256x8xf32>,
    return
  }
  func.func @transform_0(%arg0: i32, %arg1: i32) -> (i32, i32, i32) {
    %c0_i32 = arith.constant 0 : i32
    %c0_i32_0 = arith.constant 0 : i32
    return %arg0, %arg1, %c0_i32 : i32, i32, i32
  }
  func.func @transform_1(%arg0: i32, %arg1: i32) -> (i32, i32, i32) {
    %c0_i32 = arith.constant 0 : i32
    %c0_i32_0 = arith.constant 0 : i32
    %c0_i32_1 = arith.constant 0 : i32
    %c0_i32_2 = arith.constant 0 : i32
    return %c0_i32, %c0_i32_0, %c0_i32_1 : i32, i32, i32
  }
  func.func @transform_2(%arg0: i32, %arg1: i32) -> (i32, i32, i32) {
    %c0_i32 = arith.constant 0 : i32
    %c0_i32_0 = arith.constant 0 : i32
    %c0_i32_1 = arith.constant 0 : i32
    %c0_i32_2 = arith.constant 0 : i32
    return %c0_i32, %c0_i32_0, %c0_i32_1 : i32, i32, i32
  }
  func.func @transform_3(%arg0: i32, %arg1: i32) -> (i32, i32, i32) {
    %c0_i32 = arith.constant 0 : i32
    %c0_i32_0 = arith.constant 0 : i32
    return %arg0, %arg1, %c0_i32 : i32, i32, i32
  }
}

</mosaic_0001>

<llo_original>
// kernel: unetconv2_forward_nhwc.3
$region0: #{unetconv2_forward_nhwc.3}
  #allocation0 [shape = 'u32[]', space=smem, size = 0x4, offset = 0x4, fixed_abs, tag = 'smem constant byte address 0x4 - core index']
  #allocation1 [shape = 'u32[144,128]{1,0:T(1,128)}', space=vmem, size = 0x12000, scoped, tag = 'internal scratch']
  %s0 = inlined_call_operand.vmem [shape: f32[2,256,8], index: 0, kind: input, shape index: {}]
  %s1 = inlined_call_operand.vmem [shape: f32[1,1,8], index: 1, kind: input, shape index: {}]
  %s2 = inlined_call_operand.vmem [shape: f32[1,1,8], index: 2, kind: input, shape index: {}]
  %s3 = inlined_call_operand.vmem [shape: f32[2,256,8], index: 3, kind: output, shape index: {}]
  %s4 = sld [smem:[#allocation0]]
  $region45: #{unetconv2_forward_nhwc.3} parent=0
    _
  %s6 = ssub.s32 1, %s4
  %s7 = scalar_select 0, %s6, %s4
  loop: start=0, step=1, limit=4
  $region2: #{unetconv2_forward_nhwc.3} parent=0 // loop_pre_header
    _
  $region3: #{unetconv2_forward_nhwc.3} parent=0 // loop_header
    %s9 = sphi 0, %s13
    %p10 = scmp.ge.s32.totalorder %s9, 4
    %s16 = sphi 0, %s28
    %s17 = sphi 0, %s24
    %s18 = sphi 0, %s16
    %s19 = sphi 0, %s17
    %s20 = sphi 0, %s18
    %s21 = sphi 0, %s19
    %s33 = sphi 0, %s35
    %s36 = sphi 0, %s33
    %s37 = sphi 0, %s36
    %s53 = sphi 0, %s37
    %s57 = sphi 0, %s57
    %s59 = sphi 0, %s57
    %s60 = sphi 0, %s59
    %s74 = sphi 0, %s60
    %s78 = sphi 0, %s78
    %s80 = sphi 0, %s78
    %s81 = sphi 0, %s80
    %s95 = sphi 0, %s81
    %s103 = sphi 0, %s105
    %s106 = sphi 0, %s103
    %s107 = sphi 0, %s106
    %s123 = sphi 0, %s107
  $region4: #{unetconv2_forward_nhwc.3} parent=0 // loop_header_branch
    %12 = sbr.rel (%p10) target = $region8
  $region5: #{unetconv2_forward_nhwc.3} parent=0 // loop_body
    %s14 = ssub.s32 %s9, 1
    %s15 = ssub.s32 %s9, 2
    %s22 = sadd.s32 1, %s17
    %p23 = scmp.ge.s32.totalorder %s22, 1
    %s24 = scalar_select %p23, 0, %s22
    %s25 = sadd.s32 1, %s16
    %s26 = scalar_select %p23, %s25, %s16
    %p27 = scmp.ge.s32.totalorder %s26, 2
    %s28 = scalar_select %p27, 0, %s26
    %s29 = ssub.s32 %s16, %s28
    %s30 = ssub.s32 %s17, %s24
    %s31 = sor.u32 %s29, %s30
    %p32 = scmp.eq.s32.totalorder %s31, 0
    %s34 = sadd.s32 %s33, 1
    %s35 = scalar_select %p32, %s33, %s34
    %p38 = pneg %p32
    %p39 = scmp.eq.s32.totalorder %s9, 1
    %p40 = por %p38, %p39
    %p41 = scmp.ne.s32.totalorder %s33, %s36
    %p42 = scmp.eq.s32.totalorder %s9, 0
    %p43 = por %p41, %p42
    %p44 = scmp.ne.s32.totalorder %s33, %s36
    %p45 = scmp.eq.s32.totalorder %s14, 1
    %p46 = por %p44, %p45
    %p47 = scmp.ne.s32.totalorder %s36, %s37
    %p48 = scmp.eq.s32.totalorder %s14, 0
    %p49 = por %p47, %p48
    %p50 = scmp.ne.s32.totalorder %s36, %s37
    %p51 = scmp.eq.s32.totalorder %s15, 1
    %p52 = por %p50, %p51
    %p54 = scmp.ne.s32.totalorder %s37, %s53
    %p55 = scmp.eq.s32.totalorder %s15, 0
    %p56 = por %p54, %p55
    %s58 = sadd.s32 %s57, 1
    %p61 = scmp.eq.s32.totalorder %s9, 1
    %p62 = scmp.ne.s32.totalorder %s57, %s59
    %p63 = scmp.eq.s32.totalorder %s9, 0
    %p64 = por %p62, %p63
    %p65 = scmp.ne.s32.totalorder %s57, %s59
    %p66 = scmp.eq.s32.totalorder %s14, 1
    %p67 = por %p65, %p66
    %p68 = scmp.ne.s32.totalorder %s59, %s60
    %p69 = scmp.eq.s32.totalorder %s14, 0
    %p70 = por %p68, %p69
    %p71 = scmp.ne.s32.totalorder %s59, %s60
    %p72 = scmp.eq.s32.totalorder %s15, 1
    %p73 = por %p71, %p72
    %p75 = scmp.ne.s32.totalorder %s60, %s74
    %p76 = scmp.eq.s32.totalorder %s15, 0
    %p77 = por %p75, %p76
    %s79 = sadd.s32 %s78, 1
    %p82 = scmp.eq.s32.totalorder %s9, 1
    %p83 = scmp.ne.s32.totalorder %s78, %s80
    %p84 = scmp.eq.s32.totalorder %s9, 0
    %p85 = por %p83, %p84
    %p86 = scmp.ne.s32.totalorder %s78, %s80
    %p87 = scmp.eq.s32.totalorder %s14, 1
    %p88 = por %p86, %p87
    %p89 = scmp.ne.s32.totalorder %s80, %s81
    %p90 = scmp.eq.s32.totalorder %s14, 0
    %p91 = por %p89, %p90
    %p92 = scmp.ne.s32.totalorder %s80, %s81
    %p93 = scmp.eq.s32.totalorder %s15, 1
    %p94 = por %p92, %p93
    %p96 = scmp.ne.s32.totalorder %s81, %s95
    %p97 = scmp.eq.s32.totalorder %s15, 0
    %p98 = por %p96, %p97
    %s99 = ssub.s32 %s16, %s28
    %s100 = ssub.s32 %s17, %s24
    %s101 = sor.u32 %s99, %s100
    %p102 = scmp.eq.s32.totalorder %s101, 0
    %s104 = sadd.s32 %s103, 1
    %s105 = scalar_select %p102, %s103, %s104
    %p108 = pneg %p102
    %p109 = scmp.eq.s32.totalorder %s9, 1
    %p110 = por %p108, %p109
    %p111 = scmp.ne.s32.totalorder %s103, %s106
    %p112 = scmp.eq.s32.totalorder %s9, 0
    %p113 = por %p111, %p112
    %p114 = scmp.ne.s32.totalorder %s103, %s106
    %p115 = scmp.eq.s32.totalorder %s14, 1
    %p116 = por %p114, %p115
    %p117 = scmp.ne.s32.totalorder %s106, %s107
    %p118 = scmp.eq.s32.totalorder %s14, 0
    %p119 = por %p117, %p118
    %p120 = scmp.ne.s32.totalorder %s106, %s107
    %p121 = scmp.eq.s32.totalorder %s15, 1
    %p122 = por %p120, %p121
    %p124 = scmp.ne.s32.totalorder %s107, %s123
    %p125 = scmp.eq.s32.totalorder %s15, 0
    %p126 = por %p124, %p125
    %p127 = scmp.le.s32.totalorder 1, %s9
    %p128 = scmp.lt.s32.totalorder %s9, 3
    %p129 = pnand %p127, %p128
    %p130 = pneg %p129
    // Predicated region
    $region9: #{unetconv2_forward_nhwc.3} parent=5 // pred_check
      _
    $region10: #{unetconv2_forward_nhwc.3} parent=5 // pred_check_branch
      %132 = sbr.rel (%p129) target = $region12
    $region11: #{unetconv2_forward_nhwc.3} parent=5 // pred_region
      %s133 = ssub.s32 %s9, 1
      // Predicated region
      $region13: #{unetconv2_forward_nhwc.3} parent=11 // pred_check
        %p134 = pneg %p70
      $region14: #{unetconv2_forward_nhwc.3} parent=11 // pred_check_branch
        %136 = sbr.rel (%p134) target = $region16
      $region15: #{unetconv2_forward_nhwc.3} parent=11 // pred_region
        _
      $region16: #{unetconv2_forward_nhwc.3} parent=11 // pred_fallthru
        _
      // Predicated region
      $region17: #{unetconv2_forward_nhwc.3} parent=11 // pred_check
        %p137 = pneg %p91
      $region18: #{unetconv2_forward_nhwc.3} parent=11 // pred_check_branch
        %139 = sbr.rel (%p137) target = $region20
      $region19: #{unetconv2_forward_nhwc.3} parent=11 // pred_region
        _
      $region20: #{unetconv2_forward_nhwc.3} parent=11 // pred_fallthru
        _
    $region12: #{unetconv2_forward_nhwc.3} parent=5 // pred_fallthru
      _
    %p140 = scmp.lt.s32.totalorder %s9, 2
    // Predicated region
    $region21: #{unetconv2_forward_nhwc.3} parent=5 // pred_check
      %p141 = pneg %p140
    $region22: #{unetconv2_forward_nhwc.3} parent=5 // pred_check_branch
      %143 = sbr.rel (%p141) target = $region24
    $region23: #{unetconv2_forward_nhwc.3} parent=5 // pred_region
      // Predicated region
      $region25: #{unetconv2_forward_nhwc.3} parent=23 // pred_check
        %p144 = pneg %p43
      $region26: #{unetconv2_forward_nhwc.3} parent=23 // pred_check_branch
        %146 = sbr.rel (%p144) target = $region28
      $region27: #{unetconv2_forward_nhwc.3} parent=23 // pred_region
        %s147 = smul.u32 32, %s17
        %p148 = scmp.lt.s32.totalorder %s16, 1
        %s149 = scalar_select %p148, %s16, 1
        %p150 = scmp.lt.s32.totalorder %s147, 31
        %s151 = scalar_select %p150, %s147, 31
        %s152 = smul.addr %s149, 32
        %s153 = sadd.s32 %s151, %s152
        %s154 = smul.addr %s153, 8
        %s155 = scalar_lea.vmem %s0, %s154
        %s156 = smul.u32 32, %s17
      $region28: #{unetconv2_forward_nhwc.3} parent=23 // pred_fallthru
        _
    $region24: #{unetconv2_forward_nhwc.3} parent=5 // pred_fallthru
      _
    %p157 = scmp.le.s32.totalorder 1, %s9
    %p158 = scmp.lt.s32.totalorder %s9, 3
    %p159 = pnand %p157, %p158
    %p160 = pneg %p159
    // Predicated region
    $region29: #{unetconv2_forward_nhwc.3} parent=5 // pred_check
      _
    $region30: #{unetconv2_forward_nhwc.3} parent=5 // pred_check_branch
      %162 = sbr.rel (%p159) target = $region32
    $region31: #{unetconv2_forward_nhwc.3} parent=5 // pred_region
      %s163 = ssub.s32 %s9, 1
      %s164 = smul.u32 32, %s19
      %p165 = scmp.lt.s32.totalorder %s18, 1
      %s166 = scalar_select %p165, %s18, 1
      %p167 = scmp.lt.s32.totalorder %s164, 31
      %s168 = scalar_select %p167, %s164, 31
      %s169 = smul.addr %s166, 32
      %s170 = sadd.s32 %s168, %s169
      %s171 = smul.addr %s170, 8
      %s172 = scalar_lea.vmem %s0, %s171
      %p173 = pneg %p49
      %p174 = pneg %p46
      %p175 = pneg %p70
      %p176 = pneg %p67
      %p177 = pneg %p91
      %p178 = pneg %p88
      %p179 = pneg %p119
      %p180 = pneg %p116
      %s181 = smul.u32 32, %s19
      %p182 = scmp.lt.s32.totalorder %s18, 1
      %s183 = scalar_select %p182, %s18, 1
      %p184 = scmp.lt.s32.totalorder %s181, 31
      %s185 = scalar_select %p184, %s181, 31
      %s186 = smul.addr %s183, 32
      %s187 = sadd.s32 %s185, %s186
      %s188 = smul.addr %s187, 8
      %s189 = scalar_lea.vmem %s3, %s188
      %s190 = smul.u32 32, %s19
      %p191 = scmp.lt.s32.totalorder %s18, 1
      %s192 = scalar_select %p191, %s18, 1
      %p193 = scmp.lt.s32.totalorder %s190, 31
      %s194 = scalar_select %p193, %s190, 31
      %s195 = smul.addr %s192, 32
      %s196 = sadd.s32 %s194, %s195
      %s197 = smul.addr %s196, 8
      %s198 = scalar_lea.vmem %s0, %s197
      %s199 = smul.u32 32, %s19
      %s200 = smul.u32 32, %s19
      %p201 = scmp.lt.s32.totalorder %s18, 1
      %s202 = scalar_select %p201, %s18, 1
      %p203 = scmp.lt.s32.totalorder %s200, 31
      %s204 = scalar_select %p203, %s200, 31
      %s205 = smul.addr %s202, 32
      %s206 = sadd.s32 %s204, %s205
      %s207 = smul.addr %s206, 8
      %s208 = scalar_lea.vmem %s3, %s207
      %s209 = smul.u32 32, %s19
      %v210 = vld [vmem:[%s198] sm:$0xff]
      %v211 = vld [vmem:[%s198 + $0x8] sm:$0xff]
      %v212 = vld [vmem:[%s198 + $0x10] sm:$0xff]
      %v213 = vld [vmem:[%s198 + $0x18] sm:$0xff]
      %v214 = vld [vmem:[%s198 + $0x20] sm:$0xff]
      %v215 = vld [vmem:[%s198 + $0x28] sm:$0xff]
      %v216 = vld [vmem:[%s198 + $0x30] sm:$0xff]
      %v217 = vld [vmem:[%s198 + $0x38] sm:$0xff]
      %v218 = vld [vmem:[%s198 + $0x40] sm:$0xff]
      %v219 = vld [vmem:[%s198 + $0x48] sm:$0xff]
      %v220 = vld [vmem:[%s198 + $0x50] sm:$0xff]
      %v221 = vld [vmem:[%s198 + $0x58] sm:$0xff]
      %v222 = vld [vmem:[%s198 + $0x60] sm:$0xff]
      %v223 = vld [vmem:[%s198 + $0x68] sm:$0xff]
      %v224 = vld [vmem:[%s198 + $0x70] sm:$0xff]
      %v225 = vld [vmem:[%s198 + $0x78] sm:$0xff]
      %v226 = vld [vmem:[%s198 + $0x80] sm:$0xff]
      %v227 = vld [vmem:[%s198 + $0x88] sm:$0xff]
      %v228 = vld [vmem:[%s198 + $0x90] sm:$0xff]
      %v229 = vld [vmem:[%s198 + $0x98] sm:$0xff]
      %v230 = vld [vmem:[%s198 + $0xa0] sm:$0xff]
      %v231 = vld [vmem:[%s198 + $0xa8] sm:$0xff]
      %v232 = vld [vmem:[%s198 + $0xb0] sm:$0xff]
      %v233 = vld [vmem:[%s198 + $0xb8] sm:$0xff]
      %v234 = vld [vmem:[%s198 + $0xc0] sm:$0xff]
      %v235 = vld [vmem:[%s198 + $0xc8] sm:$0xff]
      %v236 = vld [vmem:[%s198 + $0xd0] sm:$0xff]
      %v237 = vld [vmem:[%s198 + $0xd8] sm:$0xff]
      %v238 = vld [vmem:[%s198 + $0xe0] sm:$0xff]
      %v239 = vld [vmem:[%s198 + $0xe8] sm:$0xff]
      %v240 = vld [vmem:[%s198 + $0xf0] sm:$0xff]
      %v241 = vld [vmem:[%s198 + $0xf8] sm:$0xff]
      %v242 = vld [vmem:[%s1] sm:$0x1]
      %v244 = vlaneseq
      %v245 = vshrl.u32 %v244, 7
      %v246 = vsub.s32 0, %v245
      %v247 = vrot.slane %v242, %v246
      %v249 = vmul.f32 %v210, %v247
      %v250 = vmul.f32 %v211, %v247
      %v251 = vmul.f32 %v212, %v247
      %v252 = vmul.f32 %v213, %v247
      %v253 = vmul.f32 %v214, %v247
      %v254 = vmul.f32 %v215, %v247
      %v255 = vmul.f32 %v216, %v247
      %v256 = vmul.f32 %v217, %v247
      %v257 = vmul.f32 %v218, %v247
      %v258 = vmul.f32 %v219, %v247
      %v259 = vmul.f32 %v220, %v247
      %v260 = vmul.f32 %v221, %v247
      %v261 = vmul.f32 %v222, %v247
      %v262 = vmul.f32 %v223, %v247
      %v263 = vmul.f32 %v224, %v247
      %v264 = vmul.f32 %v225, %v247
      %v265 = vmul.f32 %v226, %v247
      %v266 = vmul.f32 %v227, %v247
      %v267 = vmul.f32 %v228, %v247
      %v268 = vmul.f32 %v229, %v247
      %v269 = vmul.f32 %v230, %v247
      %v270 = vmul.f32 %v231, %v247
      %v271 = vmul.f32 %v232, %v247
      %v272 = vmul.f32 %v233, %v247
      %v273 = vmul.f32 %v234, %v247
      %v274 = vmul.f32 %v235, %v247
      %v275 = vmul.f32 %v236, %v247
      %v276 = vmul.f32 %v237, %v247
      %v277 = vmul.f32 %v238, %v247
      %v278 = vmul.f32 %v239, %v247
      %v279 = vmul.f32 %v240, %v247
      %v280 = vmul.f32 %v241, %v247
      %v281 = vld [vmem:[%s2] sm:$0x1]
      %v283 = vlaneseq
      %v284 = vshrl.u32 %v283, 7
      %v285 = vsub.s32 0, %v284
      %v286 = vrot.slane %v281, %v285
      %v288 = vadd.f32 %v249, %v286
      %v289 = vadd.f32 %v250, %v286
      %v290 = vadd.f32 %v251, %v286
      %v291 = vadd.f32 %v252, %v286
      %v292 = vadd.f32 %v253, %v286
      %v293 = vadd.f32 %v254, %v286
      %v294 = vadd.f32 %v255, %v286
      %v295 = vadd.f32 %v256, %v286
      %v296 = vadd.f32 %v257, %v286
      %v297 = vadd.f32 %v258, %v286
      %v298 = vadd.f32 %v259, %v286
      %v299 = vadd.f32 %v260, %v286
      %v300 = vadd.f32 %v261, %v286
      %v301 = vadd.f32 %v262, %v286
      %v302 = vadd.f32 %v263, %v286
      %v303 = vadd.f32 %v264, %v286
      %v304 = vadd.f32 %v265, %v286
      %v305 = vadd.f32 %v266, %v286
      %v306 = vadd.f32 %v267, %v286
      %v307 = vadd.f32 %v268, %v286
      %v308 = vadd.f32 %v269, %v286
      %v309 = vadd.f32 %v270, %v286
      %v310 = vadd.f32 %v271, %v286
      %v311 = vadd.f32 %v272, %v286
      %v312 = vadd.f32 %v273, %v286
      %v313 = vadd.f32 %v274, %v286
      %v314 = vadd.f32 %v275, %v286
      %v315 = vadd.f32 %v276, %v286
      %v316 = vadd.f32 %v277, %v286
      %v317 = vadd.f32 %v278, %v286
      %v318 = vadd.f32 %v279, %v286
      %v319 = vadd.f32 %v280, %v286
      %v320 = vmax.f32 %v288, 0.0
      %v321 = vmax.f32 %v289, 0.0
      %v322 = vmax.f32 %v290, 0.0
      %v323 = vmax.f32 %v291, 0.0
      %v324 = vmax.f32 %v292, 0.0
      %v325 = vmax.f32 %v293, 0.0
      %v326 = vmax.f32 %v294, 0.0
      %v327 = vmax.f32 %v295, 0.0
      %v328 = vmax.f32 %v296, 0.0
      %v329 = vmax.f32 %v297, 0.0
      %v330 = vmax.f32 %v298, 0.0
      %v331 = vmax.f32 %v299, 0.0
      %v332 = vmax.f32 %v300, 0.0
      %v333 = vmax.f32 %v301, 0.0
      %v334 = vmax.f32 %v302, 0.0
      %v335 = vmax.f32 %v303, 0.0
      %v336 = vmax.f32 %v304, 0.0
      %v337 = vmax.f32 %v305, 0.0
      %v338 = vmax.f32 %v306, 0.0
      %v339 = vmax.f32 %v307, 0.0
      %v340 = vmax.f32 %v308, 0.0
      %v341 = vmax.f32 %v309, 0.0
      %v342 = vmax.f32 %v310, 0.0
      %v343 = vmax.f32 %v311, 0.0
      %v344 = vmax.f32 %v312, 0.0
      %v345 = vmax.f32 %v313, 0.0
      %v346 = vmax.f32 %v314, 0.0
      %v347 = vmax.f32 %v315, 0.0
      %v348 = vmax.f32 %v316, 0.0
      %v349 = vmax.f32 %v317, 0.0
      %v350 = vmax.f32 %v318, 0.0
      %v351 = vmax.f32 %v319, 0.0
      %vm352 = vcmask 64512
      %353 = vst.msk [vmem:[%s208] sm:$0xff] %vm352, %v320
      %354 = vst.msk [vmem:[%s208 + $0x8] sm:$0xff] %vm352, %v321
      %355 = vst.msk [vmem:[%s208 + $0x10] sm:$0xff] %vm352, %v322
      %356 = vst.msk [vmem:[%s208 + $0x18] sm:$0xff] %vm352, %v323
      %357 = vst.msk [vmem:[%s208 + $0x20] sm:$0xff] %vm352, %v324
      %358 = vst.msk [vmem:[%s208 + $0x28] sm:$0xff] %vm352, %v325
      %359 = vst.msk [vmem:[%s208 + $0x30] sm:$0xff] %vm352, %v326
      %360 = vst.msk [vmem:[%s208 + $0x38] sm:$0xff] %vm352, %v327
      %361 = vst.msk [vmem:[%s208 + $0x40] sm:$0xff] %vm352, %v328
      %362 = vst.msk [vmem:[%s208 + $0x48] sm:$0xff] %vm352, %v329
      %363 = vst.msk [vmem:[%s208 + $0x50] sm:$0xff] %vm352, %v330
      %364 = vst.msk [vmem:[%s208 + $0x58] sm:$0xff] %vm352, %v331
      %365 = vst.msk [vmem:[%s208 + $0x60] sm:$0xff] %vm352, %v332
      %366 = vst.msk [vmem:[%s208 + $0x68] sm:$0xff] %vm352, %v333
      %367 = vst.msk [vmem:[%s208 + $0x70] sm:$0xff] %vm352, %v334
      %368 = vst.msk [vmem:[%s208 + $0x78] sm:$0xff] %vm352, %v335
      %369 = vst.msk [vmem:[%s208 + $0x80] sm:$0xff] %vm352, %v336
      %370 = vst.msk [vmem:[%s208 + $0x88] sm:$0xff] %vm352, %v337
      %371 = vst.msk [vmem:[%s208 + $0x90] sm:$0xff] %vm352, %v338
      %372 = vst.msk [vmem:[%s208 + $0x98] sm:$0xff] %vm352, %v339
      %373 = vst.msk [vmem:[%s208 + $0xa0] sm:$0xff] %vm352, %v340
      %374 = vst.msk [vmem:[%s208 + $0xa8] sm:$0xff] %vm352, %v341
      %375 = vst.msk [vmem:[%s208 + $0xb0] sm:$0xff] %vm352, %v342
      %376 = vst.msk [vmem:[%s208 + $0xb8] sm:$0xff] %vm352, %v343
      %377 = vst.msk [vmem:[%s208 + $0xc0] sm:$0xff] %vm352, %v344
      %378 = vst.msk [vmem:[%s208 + $0xc8] sm:$0xff] %vm352, %v345
      %379 = vst.msk [vmem:[%s208 + $0xd0] sm:$0xff] %vm352, %v346
      %380 = vst.msk [vmem:[%s208 + $0xd8] sm:$0xff] %vm352, %v347
      %381 = vst.msk [vmem:[%s208 + $0xe0] sm:$0xff] %vm352, %v348
      %382 = vst.msk [vmem:[%s208 + $0xe8] sm:$0xff] %vm352, %v349
      %383 = vst.msk [vmem:[%s208 + $0xf0] sm:$0xff] %vm352, %v350
      %384 = vst.msk [vmem:[%s208 + $0xf8] sm:$0xff] %vm352, %v351
      %s385 = smul.u32 32, %s19
      %p386 = scmp.lt.s32.totalorder %s18, 1
      %s387 = scalar_select %p386, %s18, 1
      %p388 = scmp.lt.s32.totalorder %s385, 31
      %s389 = scalar_select %p388, %s385, 31
      %s390 = smul.addr %s387, 32
      %s391 = sadd.s32 %s389, %s390
      %s392 = smul.addr %s391, 8
      %s393 = scalar_lea.vmem %s3, %s392
      // Predicated region
      $region33: #{unetconv2_forward_nhwc.3} parent=31 // pred_check
        %p394 = pneg %p116
      $region34: #{unetconv2_forward_nhwc.3} parent=31 // pred_check_branch
        %396 = sbr.rel (%p394) target = $region36
      $region35: #{unetconv2_forward_nhwc.3} parent=31 // pred_region
        %s397 = smul.u32 32, %s19
      $region36: #{unetconv2_forward_nhwc.3} parent=31 // pred_fallthru
        _
    $region32: #{unetconv2_forward_nhwc.3} parent=5 // pred_fallthru
      _
    %p398 = scmp.le.s32.totalorder 2, %s9
    // Predicated region
    $region37: #{unetconv2_forward_nhwc.3} parent=5 // pred_check
      %p399 = pneg %p398
    $region38: #{unetconv2_forward_nhwc.3} parent=5 // pred_check_branch
      %401 = sbr.rel (%p399) target = $region40
    $region39: #{unetconv2_forward_nhwc.3} parent=5 // pred_region
      %s402 = ssub.s32 %s9, 2
      // Predicated region
      $region41: #{unetconv2_forward_nhwc.3} parent=39 // pred_check
        %p403 = pneg %p122
      $region42: #{unetconv2_forward_nhwc.3} parent=39 // pred_check_branch
        %405 = sbr.rel (%p403) target = $region44
      $region43: #{unetconv2_forward_nhwc.3} parent=39 // pred_region
        %s406 = smul.u32 32, %s21
        %p407 = scmp.lt.s32.totalorder %s20, 1
        %s408 = scalar_select %p407, %s20, 1
        %p409 = scmp.lt.s32.totalorder %s406, 31
        %s410 = scalar_select %p409, %s406, 31
        %s411 = smul.addr %s408, 32
        %s412 = sadd.s32 %s410, %s411
        %s413 = smul.addr %s412, 8
        %s414 = scalar_lea.vmem %s3, %s413
      $region44: #{unetconv2_forward_nhwc.3} parent=39 // pred_fallthru
        _
    $region40: #{unetconv2_forward_nhwc.3} parent=5 // pred_fallthru
      _
  $region6: #{unetconv2_forward_nhwc.3} parent=0 // loop_footer
    %s13 = sadd.s32 1, %s9
  $region7: #{unetconv2_forward_nhwc.3} parent=0 // loop_footer_branch
    %8 = sbr.rel target = $region3
  $region8: #{unetconv2_forward_nhwc.3} parent=0 // loop_exit
    _

// kernel: unetconv2_forward_nhwc.2
$region0: #{unetconv2_forward_nhwc.2}
  #allocation0 [shape = 'u32[]', space=smem, size = 0x4, offset = 0x4, fixed_abs, tag = 'smem constant byte address 0x4 - core index']
  #allocation1 [shape = 'u32[144,128]{1,0:T(1,128)}', space=vmem, size = 0x12000, scoped, tag = 'internal scratch']
  %s0 = inlined_call_operand.vmem [shape: f32[2,16,16,4], index: 0, kind: input, shape index: {}]
  %s1 = inlined_call_operand.vmem [shape: f32[36,8], index: 1, kind: input, shape index: {}]
  %s2 = inlined_call_operand.vmem [shape: f32[1,8], index: 2, kind: input, shape index: {}]
  %s3 = inlined_call_operand.vmem [shape: f32[2,256,8], index: 3, kind: output, shape index: {0}]
  %s4 = inlined_call_operand.vmem [shape: f32[2,2,8], index: 4, kind: output, shape index: {1}]
  %5 = xla_tuple %s3, %s4
  %s6 = sld [smem:[#allocation0]]
  $region53: #{unetconv2_forward_nhwc.2} parent=0
    _
  %s8 = ssub.s32 1, %s6
  %s9 = scalar_select 0, %s8, %s6
  loop: start=0, step=1, limit=4
  $region2: #{unetconv2_forward_nhwc.2} parent=0 // loop_pre_header
    _
  $region3: #{unetconv2_forward_nhwc.2} parent=0 // loop_header
    %s11 = sphi 0, %s15
    %p12 = scmp.ge.s32.totalorder %s11, 4
    %s21 = sphi 0, %s23
    %s24 = sphi 0, %s21
    %s25 = sphi 0, %s24
    %s41 = sphi 0, %s25
    %s45 = sphi 0, %s45
    %s47 = sphi 0, %s45
    %s48 = sphi 0, %s47
    %s62 = sphi 0, %s48
    %s66 = sphi 0, %s66
    %s68 = sphi 0, %s66
    %s69 = sphi 0, %s68
    %s83 = sphi 0, %s69
    %s89 = sphi 0, %s91
    %s92 = sphi 0, %s89
    %s93 = sphi 0, %s92
    %s109 = sphi 0, %s93
    %s115 = sphi 0, %s117
    %s118 = sphi 0, %s115
    %s119 = sphi 0, %s118
    %s135 = sphi 0, %s119
  $region4: #{unetconv2_forward_nhwc.2} parent=0 // loop_header_branch
    %14 = sbr.rel (%p12) target = $region8
  $region5: #{unetconv2_forward_nhwc.2} parent=0 // loop_body
    %s16 = ssub.s32 %s11, 1
    %s17 = ssub.s32 %s11, 2
    %s18 = sadd.s32 %s11, 1
    %s19 = ssub.s32 %s11, %s18
    %p20 = scmp.eq.s32.totalorder %s19, 0
    %s22 = sadd.s32 %s21, 1
    %s23 = scalar_select %p20, %s21, %s22
    %p26 = pneg %p20
    %p27 = scmp.eq.s32.totalorder %s11, 1
    %p28 = por %p26, %p27
    %p29 = scmp.ne.s32.totalorder %s21, %s24
    %p30 = scmp.eq.s32.totalorder %s11, 0
    %p31 = por %p29, %p30
    %p32 = scmp.ne.s32.totalorder %s21, %s24
    %p33 = scmp.eq.s32.totalorder %s16, 1
    %p34 = por %p32, %p33
    %p35 = scmp.ne.s32.totalorder %s24, %s25
    %p36 = scmp.eq.s32.totalorder %s16, 0
    %p37 = por %p35, %p36
    %p38 = scmp.ne.s32.totalorder %s24, %s25
    %p39 = scmp.eq.s32.totalorder %s17, 1
    %p40 = por %p38, %p39
    %p42 = scmp.ne.s32.totalorder %s25, %s41
    %p43 = scmp.eq.s32.totalorder %s17, 0
    %p44 = por %p42, %p43
    %s46 = sadd.s32 %s45, 1
    %p49 = scmp.eq.s32.totalorder %s11, 1
    %p50 = scmp.ne.s32.totalorder %s45, %s47
    %p51 = scmp.eq.s32.totalorder %s11, 0
    %p52 = por %p50, %p51
    %p53 = scmp.ne.s32.totalorder %s45, %s47
    %p54 = scmp.eq.s32.totalorder %s16, 1
    %p55 = por %p53, %p54
    %p56 = scmp.ne.s32.totalorder %s47, %s48
    %p57 = scmp.eq.s32.totalorder %s16, 0
    %p58 = por %p56, %p57
    %p59 = scmp.ne.s32.totalorder %s47, %s48
    %p60 = scmp.eq.s32.totalorder %s17, 1
    %p61 = por %p59, %p60
    %p63 = scmp.ne.s32.totalorder %s48, %s62
    %p64 = scmp.eq.s32.totalorder %s17, 0
    %p65 = por %p63, %p64
    %s67 = sadd.s32 %s66, 1
    %p70 = scmp.eq.s32.totalorder %s11, 1
    %p71 = scmp.ne.s32.totalorder %s66, %s68
    %p72 = scmp.eq.s32.totalorder %s11, 0
    %p73 = por %p71, %p72
    %p74 = scmp.ne.s32.totalorder %s66, %s68
    %p75 = scmp.eq.s32.totalorder %s16, 1
    %p76 = por %p74, %p75
    %p77 = scmp.ne.s32.totalorder %s68, %s69
    %p78 = scmp.eq.s32.totalorder %s16, 0
    %p79 = por %p77, %p78
    %p80 = scmp.ne.s32.totalorder %s68, %s69
    %p81 = scmp.eq.s32.totalorder %s17, 1
    %p82 = por %p80, %p81
    %p84 = scmp.ne.s32.totalorder %s69, %s83
    %p85 = scmp.eq.s32.totalorder %s17, 0
    %p86 = por %p84, %p85
    %s87 = ssub.s32 %s11, %s18
    %p88 = scmp.eq.s32.totalorder %s87, 0
    %s90 = sadd.s32 %s89, 1
    %s91 = scalar_select %p88, %s89, %s90
    %p94 = pneg %p88
    %p95 = scmp.eq.s32.totalorder %s11, 1
    %p96 = por %p94, %p95
    %p97 = scmp.ne.s32.totalorder %s89, %s92
    %p98 = scmp.eq.s32.totalorder %s11, 0
    %p99 = por %p97, %p98
    %p100 = scmp.ne.s32.totalorder %s89, %s92
    %p101 = scmp.eq.s32.totalorder %s16, 1
    %p102 = por %p100, %p101
    %p103 = scmp.ne.s32.totalorder %s92, %s93
    %p104 = scmp.eq.s32.totalorder %s16, 0
    %p105 = por %p103, %p104
    %p106 = scmp.ne.s32.totalorder %s92, %s93
    %p107 = scmp.eq.s32.totalorder %s17, 1
    %p108 = por %p106, %p107
    %p110 = scmp.ne.s32.totalorder %s93, %s109
    %p111 = scmp.eq.s32.totalorder %s17, 0
    %p112 = por %p110, %p111
    %s113 = ssub.s32 %s11, %s18
    %p114 = scmp.eq.s32.totalorder %s113, 0
    %s116 = sadd.s32 %s115, 1
    %s117 = scalar_select %p114, %s115, %s116
    %p120 = pneg %p114
    %p121 = scmp.eq.s32.totalorder %s11, 1
    %p122 = por %p120, %p121
    %p123 = scmp.ne.s32.totalorder %s115, %s118
    %p124 = scmp.eq.s32.totalorder %s11, 0
    %p125 = por %p123, %p124
    %p126 = scmp.ne.s32.totalorder %s115, %s118
    %p127 = scmp.eq.s32.totalorder %s16, 1
    %p128 = por %p126, %p127
    %p129 = scmp.ne.s32.totalorder %s118, %s119
    %p130 = scmp.eq.s32.totalorder %s16, 0
    %p131 = por %p129, %p130
    %p132 = scmp.ne.s32.totalorder %s118, %s119
    %p133 = scmp.eq.s32.totalorder %s17, 1
    %p134 = por %p132, %p133
    %p136 = scmp.ne.s32.totalorder %s119, %s135
    %p137 = scmp.eq.s32.totalorder %s17, 0
    %p138 = por %p136, %p137
    %p139 = scmp.le.s32.totalorder 1, %s11
    %p140 = scmp.lt.s32.totalorder %s11, 3
    %p141 = pnand %p139, %p140
    %p142 = pneg %p141
    // Predicated region
    $region9: #{unetconv2_forward_nhwc.2} parent=5 // pred_check
      _
    $region10: #{unetconv2_forward_nhwc.2} parent=5 // pred_check_branch
      %144 = sbr.rel (%p141) target = $region12
    $region11: #{unetconv2_forward_nhwc.2} parent=5 // pred_region
      %s145 = ssub.s32 %s11, 1
      // Predicated region
      $region13: #{unetconv2_forward_nhwc.2} parent=11 // pred_check
        %p146 = pneg %p58
      $region14: #{unetconv2_forward_nhwc.2} parent=11 // pred_check_branch
        %148 = sbr.rel (%p146) target = $region16
      $region15: #{unetconv2_forward_nhwc.2} parent=11 // pred_region
        _
      $region16: #{unetconv2_forward_nhwc.2} parent=11 // pred_fallthru
        _
      // Predicated region
      $region17: #{unetconv2_forward_nhwc.2} parent=11 // pred_check
        %p149 = pneg %p79
      $region18: #{unetconv2_forward_nhwc.2} parent=11 // pred_check_branch
        %151 = sbr.rel (%p149) target = $region20
      $region19: #{unetconv2_forward_nhwc.2} parent=11 // pred_region
        _
      $region20: #{unetconv2_forward_nhwc.2} parent=11 // pred_fallthru
        _
    $region12: #{unetconv2_forward_nhwc.2} parent=5 // pred_fallthru
      _
    %p152 = scmp.lt.s32.totalorder %s11, 2
    // Predicated region
    $region21: #{unetconv2_forward_nhwc.2} parent=5 // pred_check
      %p153 = pneg %p152
    $region22: #{unetconv2_forward_nhwc.2} parent=5 // pred_check_branch
      %155 = sbr.rel (%p153) target = $region24
    $region23: #{unetconv2_forward_nhwc.2} parent=5 // pred_region
      // Predicated region
      $region25: #{unetconv2_forward_nhwc.2} parent=23 // pred_check
        %p156 = pneg %p31
      $region26: #{unetconv2_forward_nhwc.2} parent=23 // pred_check_branch
        %158 = sbr.rel (%p156) target = $region28
      $region27: #{unetconv2_forward_nhwc.2} parent=23 // pred_region
        %p159 = scmp.lt.s32.totalorder %s11, 1
        %s160 = scalar_select %p159, %s11, 1
        %s161 = smul.addr %s160, 32
        %s162 = smul.addr %s161, 8
        %s163 = scalar_lea.vmem %s0, %s162
      $region28: #{unetconv2_forward_nhwc.2} parent=23 // pred_fallthru
        _
    $region24: #{unetconv2_forward_nhwc.2} parent=5 // pred_fallthru
      _
    %p164 = scmp.le.s32.totalorder 1, %s11
    %p165 = scmp.lt.s32.totalorder %s11, 3
    %p166 = pnand %p164, %p165
    %p167 = pneg %p166
    // Predicated region
    $region29: #{unetconv2_forward_nhwc.2} parent=5 // pred_check
      _
    $region30: #{unetconv2_forward_nhwc.2} parent=5 // pred_check_branch
      %169 = sbr.rel (%p166) target = $region32
    $region31: #{unetconv2_forward_nhwc.2} parent=5 // pred_region
      %s170 = ssub.s32 %s11, 1
      %p171 = scmp.lt.s32.totalorder %s16, 1
      %s172 = scalar_select %p171, %s16, 1
      %s173 = smul.addr %s172, 32
      %s174 = smul.addr %s173, 8
      %s175 = scalar_lea.vmem %s0, %s174
      %p176 = pneg %p37
      %p177 = pneg %p34
      %p178 = pneg %p58
      %p179 = pneg %p55
      %p180 = pneg %p79
      %p181 = pneg %p76
      %p182 = pneg %p105
      %p183 = pneg %p102
      %p184 = scmp.lt.s32.totalorder %s16, 1
      %s185 = scalar_select %p184, %s16, 1
      %s186 = smul.addr %s185, 32
      %s187 = smul.addr %s186, 8
      %s188 = scalar_lea.vmem %s3, %s187
      %p189 = pneg %p131
      %p190 = pneg %p128
      %p191 = scmp.lt.s32.totalorder %s16, 1
      %s192 = scalar_select %p191, %s16, 1
      %s193 = smul.addr %s192, 2
      %s194 = scalar_lea.vmem %s4, %s193
      %p195 = scmp.lt.s32.totalorder %s16, 1
      %s196 = scalar_select %p195, %s16, 1
      %s197 = smul.addr %s196, 32
      %s198 = smul.addr %s197, 8
      %s199 = scalar_lea.vmem %s0, %s198
      %p200 = scmp.lt.s32.totalorder %s16, 1
      %s201 = scalar_select %p200, %s16, 1
      %s202 = smul.addr %s201, 32
      %s203 = smul.addr %s202, 8
      %s204 = scalar_lea.vmem %s3, %s203
      %p205 = scmp.lt.s32.totalorder %s16, 1
      %s206 = scalar_select %p205, %s16, 1
      %s207 = smul.addr %s206, 2
      %s208 = scalar_lea.vmem %s4, %s207
      %v209 = vld [vmem:[%s199] sm:$0xff]
      %v210 = vld [vmem:[%s199 + $0x8] sm:$0xff]
      %v211 = vld [vmem:[%s199 + $0x10] sm:$0xff]
      %v212 = vld [vmem:[%s199 + $0x18] sm:$0xff]
      %v213 = vld [vmem:[%s199 + $0x20] sm:$0xff]
      %v214 = vld [vmem:[%s199 + $0x28] sm:$0xff]
      %v215 = vld [vmem:[%s199 + $0x30] sm:$0xff]
      %v216 = vld [vmem:[%s199 + $0x38] sm:$0xff]
      %v217 = vld [vmem:[%s199 + $0x40] sm:$0xff]
      %v218 = vld [vmem:[%s199 + $0x48] sm:$0xff]
      %v219 = vld [vmem:[%s199 + $0x50] sm:$0xff]
      %v220 = vld [vmem:[%s199 + $0x58] sm:$0xff]
      %v221 = vld [vmem:[%s199 + $0x60] sm:$0xff]
      %v222 = vld [vmem:[%s199 + $0x68] sm:$0xff]
      %v223 = vld [vmem:[%s199 + $0x70] sm:$0xff]
      %v224 = vld [vmem:[%s199 + $0x78] sm:$0xff]
      %v225 = vld [vmem:[%s199 + $0x80] sm:$0xff]
      %v226 = vld [vmem:[%s199 + $0x88] sm:$0xff]
      %v227 = vld [vmem:[%s199 + $0x90] sm:$0xff]
      %v228 = vld [vmem:[%s199 + $0x98] sm:$0xff]
      %v229 = vld [vmem:[%s199 + $0xa0] sm:$0xff]
      %v230 = vld [vmem:[%s199 + $0xa8] sm:$0xff]
      %v231 = vld [vmem:[%s199 + $0xb0] sm:$0xff]
      %v232 = vld [vmem:[%s199 + $0xb8] sm:$0xff]
      %v233 = vld [vmem:[%s199 + $0xc0] sm:$0xff]
      %v234 = vld [vmem:[%s199 + $0xc8] sm:$0xff]
      %v235 = vld [vmem:[%s199 + $0xd0] sm:$0xff]
      %v236 = vld [vmem:[%s199 + $0xd8] sm:$0xff]
      %v237 = vld [vmem:[%s199 + $0xe0] sm:$0xff]
      %v238 = vld [vmem:[%s199 + $0xe8] sm:$0xff]
      %v239 = vld [vmem:[%s199 + $0xf0] sm:$0xff]
      %v240 = vld [vmem:[%s199 + $0xf8] sm:$0xff]
      %vm273 = vcmask 1040384
      %v274 = vrot.slane %v209, 7
      %v275 = vrot.slane %v210, 7
      %v276 = vsel %vm273, %v274, %v275
      %v277 = vrot.slane %v211, 7
      %v278 = vrot.slane %v212, 7
      %v279 = vsel %vm273, %v277, %v278
      %v280 = vrot.slane %v213, 7
      %v281 = vrot.slane %v214, 7
      %v282 = vsel %vm273, %v280, %v281
      %v283 = vrot.slane %v215, 7
      %v284 = vrot.slane %v216, 7
      %v285 = vsel %vm273, %v283, %v284
      %v286 = vrot.slane %v217, 7
      %v287 = vrot.slane %v218, 7
      %v288 = vsel %vm273, %v286, %v287
      %v289 = vrot.slane %v219, 7
      %v290 = vrot.slane %v220, 7
      %v291 = vsel %vm273, %v289, %v290
      %v292 = vrot.slane %v221, 7
      %v293 = vrot.slane %v222, 7
      %v294 = vsel %vm273, %v292, %v293
      %v295 = vrot.slane %v223, 7
      %v296 = vrot.slane %v224, 7
      %v297 = vsel %vm273, %v295, %v296
      %v298 = vrot.slane %v225, 7
      %v299 = vrot.slane %v226, 7
      %v300 = vsel %vm273, %v298, %v299
      %v301 = vrot.slane %v227, 7
      %v302 = vrot.slane %v228, 7
      %v303 = vsel %vm273, %v301, %v302
      %v304 = vrot.slane %v229, 7
      %v305 = vrot.slane %v230, 7
      %v306 = vsel %vm273, %v304, %v305
      %v307 = vrot.slane %v231, 7
      %v308 = vrot.slane %v232, 7
      %v309 = vsel %vm273, %v307, %v308
      %v310 = vrot.slane %v233, 7
      %v311 = vrot.slane %v234, 7
      %v312 = vsel %vm273, %v310, %v311
      %v313 = vrot.slane %v235, 7
      %v314 = vrot.slane %v236, 7
      %v315 = vsel %vm273, %v313, %v314
      %v316 = vrot.slane %v237, 7
      %v317 = vrot.slane %v238, 7
      %v318 = vsel %vm273, %v316, %v317
      %v319 = vrot.slane %v239, 7
      %v320 = vrot.slane %v240, 7
      %v321 = vsel %vm273, %v319, %v320
      %v369 = vsel %vm273, 0.0, %v274
      %v370 = vsel %vm273, 0.0, %v277
      %v371 = vsel %vm273, 0.0, %v280
      %v372 = vsel %vm273, 0.0, %v283
      %v373 = vsel %vm273, 0.0, %v286
      %v374 = vsel %vm273, 0.0, %v289
      %v375 = vsel %vm273, 0.0, %v292
      %v376 = vsel %vm273, 0.0, %v295
      %v377 = vsel %vm273, 0.0, %v298
      %v378 = vsel %vm273, 0.0, %v301
      %v379 = vsel %vm273, 0.0, %v304
      %v380 = vsel %vm273, 0.0, %v307
      %v381 = vsel %vm273, 0.0, %v310
      %v382 = vsel %vm273, 0.0, %v313
      %v383 = vsel %vm273, 0.0, %v316
      %v384 = vsel %vm273, 0.0, %v319
      %v385 = vsel %vm273, %v275, 0.0
      %v386 = vsel %vm273, %v278, 0.0
      %v387 = vsel %vm273, %v281, 0.0
      %v388 = vsel %vm273, %v284, 0.0
      %v389 = vsel %vm273, %v287, 0.0
      %v390 = vsel %vm273, %v290, 0.0
      %v391 = vsel %vm273, %v293, 0.0
      %v392 = vsel %vm273, %v296, 0.0
      %v393 = vsel %vm273, %v299, 0.0
      %v394 = vsel %vm273, %v302, 0.0
      %v395 = vsel %vm273, %v305, 0.0
      %v396 = vsel %vm273, %v308, 0.0
      %v397 = vsel %vm273, %v311, 0.0
      %v398 = vsel %vm273, %v314, 0.0
      %v399 = vsel %vm273, %v317, 0.0
      %v400 = vsel %vm273, %v320, 0.0
      %vm432 = vcmask 1046528
      %v433 = vrot.slane 0.0, 1
      %v434 = vsel %vm432, %v433, %v433
      %v435 = vrot.slane %v369, 1
      %v436 = vrot.slane %v276, 1
      %v437 = vsel %vm432, %v435, %v436
      %v438 = vrot.slane %v385, 1
      %v439 = vsel %vm432, %v436, %v438
      %v440 = vrot.slane %v370, 1
      %v441 = vrot.slane %v279, 1
      %v442 = vsel %vm432, %v440, %v441
      %v443 = vrot.slane %v386, 1
      %v444 = vsel %vm432, %v441, %v443
      %v445 = vrot.slane %v371, 1
      %v446 = vrot.slane %v282, 1
      %v447 = vsel %vm432, %v445, %v446
      %v448 = vrot.slane %v387, 1
      %v449 = vsel %vm432, %v446, %v448
      %v450 = vrot.slane %v372, 1
      %v451 = vrot.slane %v285, 1
      %v452 = vsel %vm432, %v450, %v451
      %v453 = vrot.slane %v388, 1
      %v454 = vsel %vm432, %v451, %v453
      %v455 = vrot.slane %v373, 1
      %v456 = vrot.slane %v288, 1
      %v457 = vsel %vm432, %v455, %v456
      %v458 = vrot.slane %v389, 1
      %v459 = vsel %vm432, %v456, %v458
      %v460 = vrot.slane %v374, 1
      %v461 = vrot.slane %v291, 1
      %v462 = vsel %vm432, %v460, %v461
      %v463 = vrot.slane %v390, 1
      %v464 = vsel %vm432, %v461, %v463
      %v465 = vrot.slane %v375, 1
      %v466 = vrot.slane %v294, 1
      %v467 = vsel %vm432, %v465, %v466
      %v468 = vrot.slane %v391, 1
      %v469 = vsel %vm432, %v466, %v468
      %v470 = vrot.slane %v376, 1
      %v471 = vrot.slane %v297, 1
      %v472 = vsel %vm432, %v470, %v471
      %v473 = vrot.slane %v392, 1
      %v474 = vsel %vm432, %v471, %v473
      %v475 = vrot.slane %v377, 1
      %v476 = vrot.slane %v300, 1
      %v477 = vsel %vm432, %v475, %v476
      %v478 = vrot.slane %v393, 1
      %v479 = vsel %vm432, %v476, %v478
      %v480 = vrot.slane %v378, 1
      %v481 = vrot.slane %v303, 1
      %v482 = vsel %vm432, %v480, %v481
      %v483 = vrot.slane %v394, 1
      %v484 = vsel %vm432, %v481, %v483
      %v485 = vrot.slane %v379, 1
      %v486 = vrot.slane %v306, 1
      %v487 = vsel %vm432, %v485, %v486
      %v488 = vrot.slane %v395, 1
      %v489 = vsel %vm432, %v486, %v488
      %v490 = vrot.slane %v380, 1
      %v491 = vrot.slane %v309, 1
      %v492 = vsel %vm432, %v490, %v491
      %v493 = vrot.slane %v396, 1
      %v494 = vsel %vm432, %v491, %v493
      %v495 = vrot.slane %v381, 1
      %v496 = vrot.slane %v312, 1
      %v497 = vsel %vm432, %v495, %v496
      %v498 = vrot.slane %v397, 1
      %v499 = vsel %vm432, %v496, %v498
      %v500 = vrot.slane %v382, 1
      %v501 = vrot.slane %v315, 1
      %v502 = vsel %vm432, %v500, %v501
      %v503 = vrot.slane %v398, 1
      %v504 = vsel %vm432, %v501, %v503
      %v505 = vrot.slane %v383, 1
      %v506 = vrot.slane %v318, 1
      %v507 = vsel %vm432, %v505, %v506
      %v508 = vrot.slane %v399, 1
      %v509 = vsel %vm432, %v506, %v508
      %510 = vrot.lane.b32.xlu0 %v434, 4
      %v511 = vpop.permute.xlu0 %510
      %512 = vrot.lane.b32.xlu0 %v437, 4
      %v513 = vpop.permute.xlu0 %512
      %514 = vrot.lane.b32.xlu0 %v439, 4
      %v515 = vpop.permute.xlu0 %514
      %516 = vrot.lane.b32.xlu0 %v442, 4
      %v517 = vpop.permute.xlu0 %516
      %518 = vrot.lane.b32.xlu0 %v444, 4
      %v519 = vpop.permute.xlu0 %518
      %520 = vrot.lane.b32.xlu0 %v447, 4
      %v521 = vpop.permute.xlu0 %520
      %522 = vrot.lane.b32.xlu0 %v449, 4
      %v523 = vpop.permute.xlu0 %522
      %524 = vrot.lane.b32.xlu0 %v452, 4
      %v525 = vpop.permute.xlu0 %524
      %526 = vrot.lane.b32.xlu0 %v454, 4
      %v527 = vpop.permute.xlu0 %526
      %528 = vrot.lane.b32.xlu0 %v457, 4
      %v529 = vpop.permute.xlu0 %528
      %530 = vrot.lane.b32.xlu0 %v459, 4
      %v531 = vpop.permute.xlu0 %530
      %532 = vrot.lane.b32.xlu0 %v462, 4
      %v533 = vpop.permute.xlu0 %532
      %534 = vrot.lane.b32.xlu0 %v464, 4
      %v535 = vpop.permute.xlu0 %534
      %536 = vrot.lane.b32.xlu0 %v467, 4
      %v537 = vpop.permute.xlu0 %536
      %538 = vrot.lane.b32.xlu0 %v469, 4
      %v539 = vpop.permute.xlu0 %538
      %540 = vrot.lane.b32.xlu0 %v472, 4
      %v541 = vpop.permute.xlu0 %540
      %542 = vrot.lane.b32.xlu0 %v474, 4
      %v543 = vpop.permute.xlu0 %542
      %544 = vrot.lane.b32.xlu0 %v477, 4
      %v545 = vpop.permute.xlu0 %544
      %546 = vrot.lane.b32.xlu0 %v479, 4
      %v547 = vpop.permute.xlu0 %546
      %548 = vrot.lane.b32.xlu0 %v482, 4
      %v549 = vpop.permute.xlu0 %548
      %550 = vrot.lane.b32.xlu0 %v484, 4
      %v551 = vpop.permute.xlu0 %550
      %552 = vrot.lane.b32.xlu0 %v487, 4
      %v553 = vpop.permute.xlu0 %552
      %554 = vrot.lane.b32.xlu0 %v489, 4
      %v555 = vpop.permute.xlu0 %554
      %556 = vrot.lane.b32.xlu0 %v492, 4
      %v557 = vpop.permute.xlu0 %556
      %558 = vrot.lane.b32.xlu0 %v494, 4
      %v559 = vpop.permute.xlu0 %558
      %560 = vrot.lane.b32.xlu0 %v497, 4
      %v561 = vpop.permute.xlu0 %560
      %562 = vrot.lane.b32.xlu0 %v499, 4
      %v563 = vpop.permute.xlu0 %562
      %564 = vrot.lane.b32.xlu0 %v502, 4
      %v565 = vpop.permute.xlu0 %564
      %566 = vrot.lane.b32.xlu0 %v504, 4
      %v567 = vpop.permute.xlu0 %566
      %568 = vrot.lane.b32.xlu0 %v507, 4
      %v569 = vpop.permute.xlu0 %568
      %570 = vrot.lane.b32.xlu0 %v509, 4
      %v571 = vpop.permute.xlu0 %570
      %vm603 = vcmask 1045504
      %v604 = vrot.slane 0.0, 2
      %v605 = vsel %vm603, %v604, %v604
      %v606 = vrot.slane %v369, 2
      %v607 = vrot.slane %v276, 2
      %v608 = vsel %vm603, %v606, %v607
      %v609 = vrot.slane %v385, 2
      %v610 = vsel %vm603, %v607, %v609
      %v611 = vrot.slane %v370, 2
      %v612 = vrot.slane %v279, 2
      %v613 = vsel %vm603, %v611, %v612
      %v614 = vrot.slane %v386, 2
      %v615 = vsel %vm603, %v612, %v614
      %v616 = vrot.slane %v371, 2
      %v617 = vrot.slane %v282, 2
      %v618 = vsel %vm603, %v616, %v617
      %v619 = vrot.slane %v387, 2
      %v620 = vsel %vm603, %v617, %v619
      %v621 = vrot.slane %v372, 2
      %v622 = vrot.slane %v285, 2
      %v623 = vsel %vm603, %v621, %v622
      %v624 = vrot.slane %v388, 2
      %v625 = vsel %vm603, %v622, %v624
      %v626 = vrot.slane %v373, 2
      %v627 = vrot.slane %v288, 2
      %v628 = vsel %vm603, %v626, %v627
      %v629 = vrot.slane %v389, 2
      %v630 = vsel %vm603, %v627, %v629
      %v631 = vrot.slane %v374, 2
      %v632 = vrot.slane %v291, 2
      %v633 = vsel %vm603, %v631, %v632
      %v634 = vrot.slane %v390, 2
      %v635 = vsel %vm603, %v632, %v634
      %v636 = vrot.slane %v375, 2
      %v637 = vrot.slane %v294, 2
      %v638 = vsel %vm603, %v636, %v637
      %v639 = vrot.slane %v391, 2
      %v640 = vsel %vm603, %v637, %v639
      %v641 = vrot.slane %v376, 2
      %v642 = vrot.slane %v297, 2
      %v643 = vsel %vm603, %v641, %v642
      %v644 = vrot.slane %v392, 2
      %v645 = vsel %vm603, %v642, %v644
      %v646 = vrot.slane %v377, 2
      %v647 = vrot.slane %v300, 2
      %v648 = vsel %vm603, %v646, %v647
      %v649 = vrot.slane %v393, 2
      %v650 = vsel %vm603, %v647, %v649
      %v651 = vrot.slane %v378, 2
      %v652 = vrot.slane %v303, 2
      %v653 = vsel %vm603, %v651, %v652
      %v654 = vrot.slane %v394, 2
      %v655 = vsel %vm603, %v652, %v654
      %v656 = vrot.slane %v379, 2
      %v657 = vrot.slane %v306, 2
      %v658 = vsel %vm603, %v656, %v657
      %v659 = vrot.slane %v395, 2
      %v660 = vsel %vm603, %v657, %v659
      %v661 = vrot.slane %v380, 2
      %v662 = vrot.slane %v309, 2
      %v663 = vsel %vm603, %v661, %v662
      %v664 = vrot.slane %v396, 2
      %v665 = vsel %vm603, %v662, %v664
      %v666 = vrot.slane %v381, 2
      %v667 = vrot.slane %v312, 2
      %v668 = vsel %vm603, %v666, %v667
      %v669 = vrot.slane %v397, 2
      %v670 = vsel %vm603, %v667, %v669
      %v671 = vrot.slane %v382, 2
      %v672 = vrot.slane %v315, 2
      %v673 = vsel %vm603, %v671, %v672
      %v674 = vrot.slane %v398, 2
      %v675 = vsel %vm603, %v672, %v674
      %v676 = vrot.slane %v383, 2
      %v677 = vrot.slane %v318, 2
      %v678 = vsel %vm603, %v676, %v677
      %v679 = vrot.slane %v399, 2
      %v680 = vsel %vm603, %v677, %v679
      %681 = vrot.lane.b32.xlu0 %v605, 8
      %v682 = vpop.permute.xlu0 %681
      %683 = vrot.lane.b32.xlu0 %v608, 8
      %v684 = vpop.permute.xlu0 %683
      %685 = vrot.lane.b32.xlu0 %v610, 8
      %v686 = vpop.permute.xlu0 %685
      %687 = vrot.lane.b32.xlu0 %v613, 8
      %v688 = vpop.permute.xlu0 %687
      %689 = vrot.lane.b32.xlu0 %v615, 8
      %v690 = vpop.permute.xlu0 %689
      %691 = vrot.lane.b32.xlu0 %v618, 8
      %v692 = vpop.permute.xlu0 %691
      %693 = vrot.lane.b32.xlu0 %v620, 8
      %v694 = vpop.permute.xlu0 %693
      %695 = vrot.lane.b32.xlu0 %v623, 8
      %v696 = vpop.permute.xlu0 %695
      %697 = vrot.lane.b32.xlu0 %v625, 8
      %v698 = vpop.permute.xlu0 %697
      %699 = vrot.lane.b32.xlu0 %v628, 8
      %v700 = vpop.permute.xlu0 %699
      %701 = vrot.lane.b32.xlu0 %v630, 8
      %v702 = vpop.permute.xlu0 %701
      %703 = vrot.lane.b32.xlu0 %v633, 8
      %v704 = vpop.permute.xlu0 %703
      %705 = vrot.lane.b32.xlu0 %v635, 8
      %v706 = vpop.permute.xlu0 %705
      %707 = vrot.lane.b32.xlu0 %v638, 8
      %v708 = vpop.permute.xlu0 %707
      %709 = vrot.lane.b32.xlu0 %v640, 8
      %v710 = vpop.permute.xlu0 %709
      %711 = vrot.lane.b32.xlu0 %v643, 8
      %v712 = vpop.permute.xlu0 %711
      %713 = vrot.lane.b32.xlu0 %v645, 8
      %v714 = vpop.permute.xlu0 %713
      %715 = vrot.lane.b32.xlu0 %v648, 8
      %v716 = vpop.permute.xlu0 %715
      %717 = vrot.lane.b32.xlu0 %v650, 8
      %v718 = vpop.permute.xlu0 %717
      %719 = vrot.lane.b32.xlu0 %v653, 8
      %v720 = vpop.permute.xlu0 %719
      %721 = vrot.lane.b32.xlu0 %v655, 8
      %v722 = vpop.permute.xlu0 %721
      %723 = vrot.lane.b32.xlu0 %v658, 8
      %v724 = vpop.permute.xlu0 %723
      %725 = vrot.lane.b32.xlu0 %v660, 8
      %v726 = vpop.permute.xlu0 %725
      %727 = vrot.lane.b32.xlu0 %v663, 8
      %v728 = vpop.permute.xlu0 %727
      %729 = vrot.lane.b32.xlu0 %v665, 8
      %v730 = vpop.permute.xlu0 %729
      %731 = vrot.lane.b32.xlu0 %v668, 8
      %v732 = vpop.permute.xlu0 %731
      %733 = vrot.lane.b32.xlu0 %v670, 8
      %v734 = vpop.permute.xlu0 %733
      %735 = vrot.lane.b32.xlu0 %v673, 8
      %v736 = vpop.permute.xlu0 %735
      %737 = vrot.lane.b32.xlu0 %v675, 8
      %v738 = vpop.permute.xlu0 %737
      %739 = vrot.lane.b32.xlu0 %v678, 8
      %v740 = vpop.permute.xlu0 %739
      %741 = vrot.lane.b32.xlu0 %v680, 8
      %v742 = vpop.permute.xlu0 %741
      %775 = vrot.lane.b32.xlu0 %v369, 12
      %v776 = vpop.permute.xlu0 %775
      %777 = vrot.lane.b32.xlu0 %v276, 12
      %v778 = vpop.permute.xlu0 %777
      %779 = vrot.lane.b32.xlu0 %v370, 12
      %v780 = vpop.permute.xlu0 %779
      %781 = vrot.lane.b32.xlu0 %v279, 12
      %v782 = vpop.permute.xlu0 %781
      %783 = vrot.lane.b32.xlu0 %v371, 12
      %v784 = vpop.permute.xlu0 %783
      %785 = vrot.lane.b32.xlu0 %v282, 12
      %v786 = vpop.permute.xlu0 %785
      %787 = vrot.lane.b32.xlu0 %v372, 12
      %v788 = vpop.permute.xlu0 %787
      %789 = vrot.lane.b32.xlu0 %v285, 12
      %v790 = vpop.permute.xlu0 %789
      %791 = vrot.lane.b32.xlu0 %v373, 12
      %v792 = vpop.permute.xlu0 %791
      %793 = vrot.lane.b32.xlu0 %v288, 12
      %v794 = vpop.permute.xlu0 %793
      %795 = vrot.lane.b32.xlu0 %v374, 12
      %v796 = vpop.permute.xlu0 %795
      %797 = vrot.lane.b32.xlu0 %v291, 12
      %v798 = vpop.permute.xlu0 %797
      %799 = vrot.lane.b32.xlu0 %v375, 12
      %v800 = vpop.permute.xlu0 %799
      %801 = vrot.lane.b32.xlu0 %v294, 12
      %v802 = vpop.permute.xlu0 %801
      %803 = vrot.lane.b32.xlu0 %v376, 12
      %v804 = vpop.permute.xlu0 %803
      %805 = vrot.lane.b32.xlu0 %v297, 12
      %v806 = vpop.permute.xlu0 %805
      %807 = vrot.lane.b32.xlu0 %v377, 12
      %v808 = vpop.permute.xlu0 %807
      %809 = vrot.lane.b32.xlu0 %v300, 12
      %v810 = vpop.permute.xlu0 %809
      %811 = vrot.lane.b32.xlu0 %v378, 12
      %v812 = vpop.permute.xlu0 %811
      %813 = vrot.lane.b32.xlu0 %v303, 12
      %v814 = vpop.permute.xlu0 %813
      %815 = vrot.lane.b32.xlu0 %v379, 12
      %v816 = vpop.permute.xlu0 %815
      %817 = vrot.lane.b32.xlu0 %v306, 12
      %v818 = vpop.permute.xlu0 %817
      %819 = vrot.lane.b32.xlu0 %v380, 12
      %v820 = vpop.permute.xlu0 %819
      %821 = vrot.lane.b32.xlu0 %v309, 12
      %v822 = vpop.permute.xlu0 %821
      %823 = vrot.lane.b32.xlu0 %v381, 12
      %v824 = vpop.permute.xlu0 %823
      %825 = vrot.lane.b32.xlu0 %v312, 12
      %v826 = vpop.permute.xlu0 %825
      %827 = vrot.lane.b32.xlu0 %v382, 12
      %v828 = vpop.permute.xlu0 %827
      %829 = vrot.lane.b32.xlu0 %v315, 12
      %v830 = vpop.permute.xlu0 %829
      %831 = vrot.lane.b32.xlu0 %v383, 12
      %v832 = vpop.permute.xlu0 %831
      %833 = vrot.lane.b32.xlu0 %v318, 12
      %v834 = vpop.permute.xlu0 %833
      %835 = vrot.lane.b32.xlu0 %v384, 12
      %v836 = vpop.permute.xlu0 %835
      %837 = vrot.lane.b32.xlu0 %v321, 12
      %v838 = vpop.permute.xlu0 %837
      %v872 = vrot.slane %v384, 1
      %v873 = vrot.slane %v321, 1
      %v874 = vsel %vm432, %v872, %v873
      %v875 = vrot.slane %v400, 1
      %v876 = vsel %vm432, %v873, %v875
      %877 = vrot.lane.b32.xlu0 %v437, 16
      %v878 = vpop.permute.xlu0 %877
      %879 = vrot.lane.b32.xlu0 %v439, 16
      %v880 = vpop.permute.xlu0 %879
      %881 = vrot.lane.b32.xlu0 %v442, 16
      %v882 = vpop.permute.xlu0 %881
      %883 = vrot.lane.b32.xlu0 %v444, 16
      %v884 = vpop.permute.xlu0 %883
      %885 = vrot.lane.b32.xlu0 %v447, 16
      %v886 = vpop.permute.xlu0 %885
      %887 = vrot.lane.b32.xlu0 %v449, 16
      %v888 = vpop.permute.xlu0 %887
      %889 = vrot.lane.b32.xlu0 %v452, 16
      %v890 = vpop.permute.xlu0 %889
      %891 = vrot.lane.b32.xlu0 %v454, 16
      %v892 = vpop.permute.xlu0 %891
      %893 = vrot.lane.b32.xlu0 %v457, 16
      %v894 = vpop.permute.xlu0 %893
      %895 = vrot.lane.b32.xlu0 %v459, 16
      %v896 = vpop.permute.xlu0 %895
      %897 = vrot.lane.b32.xlu0 %v462, 16
      %v898 = vpop.permute.xlu0 %897
      %899 = vrot.lane.b32.xlu0 %v464, 16
      %v900 = vpop.permute.xlu0 %899
      %901 = vrot.lane.b32.xlu0 %v467, 16
      %v902 = vpop.permute.xlu0 %901
      %903 = vrot.lane.b32.xlu0 %v469, 16
      %v904 = vpop.permute.xlu0 %903
      %905 = vrot.lane.b32.xlu0 %v472, 16
      %v906 = vpop.permute.xlu0 %905
      %907 = vrot.lane.b32.xlu0 %v474, 16
      %v908 = vpop.permute.xlu0 %907
      %909 = vrot.lane.b32.xlu0 %v477, 16
      %v910 = vpop.permute.xlu0 %909
      %911 = vrot.lane.b32.xlu0 %v479, 16
      %v912 = vpop.permute.xlu0 %911
      %913 = vrot.lane.b32.xlu0 %v482, 16
      %v914 = vpop.permute.xlu0 %913
      %915 = vrot.lane.b32.xlu0 %v484, 16
      %v916 = vpop.permute.xlu0 %915
      %917 = vrot.lane.b32.xlu0 %v487, 16
      %v918 = vpop.permute.xlu0 %917
      %919 = vrot.lane.b32.xlu0 %v489, 16
      %v920 = vpop.permute.xlu0 %919
      %921 = vrot.lane.b32.xlu0 %v492, 16
      %v922 = vpop.permute.xlu0 %921
      %923 = vrot.lane.b32.xlu0 %v494, 16
      %v924 = vpop.permute.xlu0 %923
      %925 = vrot.lane.b32.xlu0 %v497, 16
      %v926 = vpop.permute.xlu0 %925
      %927 = vrot.lane.b32.xlu0 %v499, 16
      %v928 = vpop.permute.xlu0 %927
      %929 = vrot.lane.b32.xlu0 %v502, 16
      %v930 = vpop.permute.xlu0 %929
      %931 = vrot.lane.b32.xlu0 %v504, 16
      %v932 = vpop.permute.xlu0 %931
      %933 = vrot.lane.b32.xlu0 %v507, 16
      %v934 = vpop.permute.xlu0 %933
      %935 = vrot.lane.b32.xlu0 %v509, 16
      %v936 = vpop.permute.xlu0 %935
      %937 = vrot.lane.b32.xlu0 %v874, 16
      %v938 = vpop.permute.xlu0 %937
      %939 = vrot.lane.b32.xlu0 %v876, 16
      %v940 = vpop.permute.xlu0 %939
      %v973 = vrot.slane %v384, 2
      %v974 = vrot.slane %v321, 2
      %v975 = vsel %vm603, %v973, %v974
      %v976 = vrot.slane %v400, 2
      %v977 = vsel %vm603, %v974, %v976
      %978 = vrot.lane.b32.xlu0 %v608, 20
      %v979 = vpop.permute.xlu0 %978
      %980 = vrot.lane.b32.xlu0 %v610, 20
      %v981 = vpop.permute.xlu0 %980
      %982 = vrot.lane.b32.xlu0 %v613, 20
      %v983 = vpop.permute.xlu0 %982
      %984 = vrot.lane.b32.xlu0 %v615, 20
      %v985 = vpop.permute.xlu0 %984
      %986 = vrot.lane.b32.xlu0 %v618, 20
      %v987 = vpop.permute.xlu0 %986
      %988 = vrot.lane.b32.xlu0 %v620, 20
      %v989 = vpop.permute.xlu0 %988
      %990 = vrot.lane.b32.xlu0 %v623, 20
      %v991 = vpop.permute.xlu0 %990
      %992 = vrot.lane.b32.xlu0 %v625, 20
      %v993 = vpop.permute.xlu0 %992
      %994 = vrot.lane.b32.xlu0 %v628, 20
      %v995 = vpop.permute.xlu0 %994
      %996 = vrot.lane.b32.xlu0 %v630, 20
      %v997 = vpop.permute.xlu0 %996
      %998 = vrot.lane.b32.xlu0 %v633, 20
      %v999 = vpop.permute.xlu0 %998
      %1000 = vrot.lane.b32.xlu0 %v635, 20
      %v1001 = vpop.permute.xlu0 %1000
      %1002 = vrot.lane.b32.xlu0 %v638, 20
      %v1003 = vpop.permute.xlu0 %1002
      %1004 = vrot.lane.b32.xlu0 %v640, 20
      %v1005 = vpop.permute.xlu0 %1004
      %1006 = vrot.lane.b32.xlu0 %v643, 20
      %v1007 = vpop.permute.xlu0 %1006
      %1008 = vrot.lane.b32.xlu0 %v645, 20
      %v1009 = vpop.permute.xlu0 %1008
      %1010 = vrot.lane.b32.xlu0 %v648, 20
      %v1011 = vpop.permute.xlu0 %1010
      %1012 = vrot.lane.b32.xlu0 %v650, 20
      %v1013 = vpop.permute.xlu0 %1012
      %1014 = vrot.lane.b32.xlu0 %v653, 20
      %v1015 = vpop.permute.xlu0 %1014
      %1016 = vrot.lane.b32.xlu0 %v655, 20
      %v1017 = vpop.permute.xlu0 %1016
      %1018 = vrot.lane.b32.xlu0 %v658, 20
      %v1019 = vpop.permute.xlu0 %1018
      %1020 = vrot.lane.b32.xlu0 %v660, 20
      %v1021 = vpop.permute.xlu0 %1020
      %1022 = vrot.lane.b32.xlu0 %v663, 20
      %v1023 = vpop.permute.xlu0 %1022
      %1024 = vrot.lane.b32.xlu0 %v665, 20
      %v1025 = vpop.permute.xlu0 %1024
      %1026 = vrot.lane.b32.xlu0 %v668, 20
      %v1027 = vpop.permute.xlu0 %1026
      %1028 = vrot.lane.b32.xlu0 %v670, 20
      %v1029 = vpop.permute.xlu0 %1028
      %1030 = vrot.lane.b32.xlu0 %v673, 20
      %v1031 = vpop.permute.xlu0 %1030
      %1032 = vrot.lane.b32.xlu0 %v675, 20
      %v1033 = vpop.permute.xlu0 %1032
      %1034 = vrot.lane.b32.xlu0 %v678, 20
      %v1035 = vpop.permute.xlu0 %1034
      %1036 = vrot.lane.b32.xlu0 %v680, 20
      %v1037 = vpop.permute.xlu0 %1036
      %1038 = vrot.lane.b32.xlu0 %v975, 20
      %v1039 = vpop.permute.xlu0 %1038
      %1040 = vrot.lane.b32.xlu0 %v977, 20
      %v1041 = vpop.permute.xlu0 %1040
      %1074 = vrot.lane.b32.xlu0 %v370, 24
      %v1075 = vpop.permute.xlu0 %1074
      %1076 = vrot.lane.b32.xlu0 %v279, 24
      %v1077 = vpop.permute.xlu0 %1076
      %1078 = vrot.lane.b32.xlu0 %v371, 24
      %v1079 = vpop.permute.xlu0 %1078
      %1080 = vrot.lane.b32.xlu0 %v282, 24
      %v1081 = vpop.permute.xlu0 %1080
      %1082 = vrot.lane.b32.xlu0 %v372, 24
      %v1083 = vpop.permute.xlu0 %1082
      %1084 = vrot.lane.b32.xlu0 %v285, 24
      %v1085 = vpop.permute.xlu0 %1084
      %1086 = vrot.lane.b32.xlu0 %v373, 24
      %v1087 = vpop.permute.xlu0 %1086
      %1088 = vrot.lane.b32.xlu0 %v288, 24
      %v1089 = vpop.permute.xlu0 %1088
      %1090 = vrot.lane.b32.xlu0 %v374, 24
      %v1091 = vpop.permute.xlu0 %1090
      %1092 = vrot.lane.b32.xlu0 %v291, 24
      %v1093 = vpop.permute.xlu0 %1092
      %1094 = vrot.lane.b32.xlu0 %v375, 24
      %v1095 = vpop.permute.xlu0 %1094
      %1096 = vrot.lane.b32.xlu0 %v294, 24
      %v1097 = vpop.permute.xlu0 %1096
      %1098 = vrot.lane.b32.xlu0 %v376, 24
      %v1099 = vpop.permute.xlu0 %1098
      %1100 = vrot.lane.b32.xlu0 %v297, 24
      %v1101 = vpop.permute.xlu0 %1100
      %1102 = vrot.lane.b32.xlu0 %v377, 24
      %v1103 = vpop.permute.xlu0 %1102
      %1104 = vrot.lane.b32.xlu0 %v300, 24
      %v1105 = vpop.permute.xlu0 %1104
      %1106 = vrot.lane.b32.xlu0 %v378, 24
      %v1107 = vpop.permute.xlu0 %1106
      %1108 = vrot.lane.b32.xlu0 %v303, 24
      %v1109 = vpop.permute.xlu0 %1108
      %1110 = vrot.lane.b32.xlu0 %v379, 24
      %v1111 = vpop.permute.xlu0 %1110
      %1112 = vrot.lane.b32.xlu0 %v306, 24
      %v1113 = vpop.permute.xlu0 %1112
      %1114 = vrot.lane.b32.xlu0 %v380, 24
      %v1115 = vpop.permute.xlu0 %1114
      %1116 = vrot.lane.b32.xlu0 %v309, 24
      %v1117 = vpop.permute.xlu0 %1116
      %1118 = vrot.lane.b32.xlu0 %v381, 24
      %v1119 = vpop.permute.xlu0 %1118
      %1120 = vrot.lane.b32.xlu0 %v312, 24
      %v1121 = vpop.permute.xlu0 %1120
      %1122 = vrot.lane.b32.xlu0 %v382, 24
      %v1123 = vpop.permute.xlu0 %1122
      %1124 = vrot.lane.b32.xlu0 %v315, 24
      %v1125 = vpop.permute.xlu0 %1124
      %1126 = vrot.lane.b32.xlu0 %v383, 24
      %v1127 = vpop.permute.xlu0 %1126
      %1128 = vrot.lane.b32.xlu0 %v318, 24
      %v1129 = vpop.permute.xlu0 %1128
      %1130 = vrot.lane.b32.xlu0 %v384, 24
      %v1131 = vpop.permute.xlu0 %1130
      %1132 = vrot.lane.b32.xlu0 %v321, 24
      %v1133 = vpop.permute.xlu0 %1132
      %1134 = vrot.lane.b32.xlu0 0.0, 24
      %v1135 = vpop.permute.xlu0 %1134
      %1167 = vrot.lane.b32.xlu0 %v442, 28
      %v1168 = vpop.permute.xlu0 %1167
      %1169 = vrot.lane.b32.xlu0 %v444, 28
      %v1170 = vpop.permute.xlu0 %1169
      %1171 = vrot.lane.b32.xlu0 %v447, 28
      %v1172 = vpop.permute.xlu0 %1171
      %1173 = vrot.lane.b32.xlu0 %v449, 28
      %v1174 = vpop.permute.xlu0 %1173
      %1175 = vrot.lane.b32.xlu0 %v452, 28
      %v1176 = vpop.permute.xlu0 %1175
      %1177 = vrot.lane.b32.xlu0 %v454, 28
      %v1178 = vpop.permute.xlu0 %1177
      %1179 = vrot.lane.b32.xlu0 %v457, 28
      %v1180 = vpop.permute.xlu0 %1179
      %1181 = vrot.lane.b32.xlu0 %v459, 28
      %v1182 = vpop.permute.xlu0 %1181
      %1183 = vrot.lane.b32.xlu0 %v462, 28
      %v1184 = vpop.permute.xlu0 %1183
      %1185 = vrot.lane.b32.xlu0 %v464, 28
      %v1186 = vpop.permute.xlu0 %1185
      %1187 = vrot.lane.b32.xlu0 %v467, 28
      %v1188 = vpop.permute.xlu0 %1187
      %1189 = vrot.lane.b32.xlu0 %v469, 28
      %v1190 = vpop.permute.xlu0 %1189
      %1191 = vrot.lane.b32.xlu0 %v472, 28
      %v1192 = vpop.permute.xlu0 %1191
      %1193 = vrot.lane.b32.xlu0 %v474, 28
      %v1194 = vpop.permute.xlu0 %1193
      %1195 = vrot.lane.b32.xlu0 %v477, 28
      %v1196 = vpop.permute.xlu0 %1195
      %1197 = vrot.lane.b32.xlu0 %v479, 28
      %v1198 = vpop.permute.xlu0 %1197
      %1199 = vrot.lane.b32.xlu0 %v482, 28
      %v1200 = vpop.permute.xlu0 %1199
      %1201 = vrot.lane.b32.xlu0 %v484, 28
      %v1202 = vpop.permute.xlu0 %1201
      %1203 = vrot.lane.b32.xlu0 %v487, 28
      %v1204 = vpop.permute.xlu0 %1203
      %1205 = vrot.lane.b32.xlu0 %v489, 28
      %v1206 = vpop.permute.xlu0 %1205
      %1207 = vrot.lane.b32.xlu0 %v492, 28
      %v1208 = vpop.permute.xlu0 %1207
      %1209 = vrot.lane.b32.xlu0 %v494, 28
      %v1210 = vpop.permute.xlu0 %1209
      %1211 = vrot.lane.b32.xlu0 %v497, 28
      %v1212 = vpop.permute.xlu0 %1211
      %1213 = vrot.lane.b32.xlu0 %v499, 28
      %v1214 = vpop.permute.xlu0 %1213
      %1215 = vrot.lane.b32.xlu0 %v502, 28
      %v1216 = vpop.permute.xlu0 %1215
      %1217 = vrot.lane.b32.xlu0 %v504, 28
      %v1218 = vpop.permute.xlu0 %1217
      %1219 = vrot.lane.b32.xlu0 %v507, 28
      %v1220 = vpop.permute.xlu0 %1219
      %1221 = vrot.lane.b32.xlu0 %v509, 28
      %v1222 = vpop.permute.xlu0 %1221
      %1223 = vrot.lane.b32.xlu0 %v874, 28
      %v1224 = vpop.permute.xlu0 %1223
      %1225 = vrot.lane.b32.xlu0 %v876, 28
      %v1226 = vpop.permute.xlu0 %1225
      %1227 = vrot.lane.b32.xlu0 %v434, 28
      %v1228 = vpop.permute.xlu0 %1227
      %1260 = vrot.lane.b32.xlu0 %v613, 32
      %v1261 = vpop.permute.xlu0 %1260
      %1262 = vrot.lane.b32.xlu0 %v615, 32
      %v1263 = vpop.permute.xlu0 %1262
      %1264 = vrot.lane.b32.xlu0 %v618, 32
      %v1265 = vpop.permute.xlu0 %1264
      %1266 = vrot.lane.b32.xlu0 %v620, 32
      %v1267 = vpop.permute.xlu0 %1266
      %1268 = vrot.lane.b32.xlu0 %v623, 32
      %v1269 = vpop.permute.xlu0 %1268
      %1270 = vrot.lane.b32.xlu0 %v625, 32
      %v1271 = vpop.permute.xlu0 %1270
      %1272 = vrot.lane.b32.xlu0 %v628, 32
      %v1273 = vpop.permute.xlu0 %1272
      %1274 = vrot.lane.b32.xlu0 %v630, 32
      %v1275 = vpop.permute.xlu0 %1274
      %1276 = vrot.lane.b32.xlu0 %v633, 32
      %v1277 = vpop.permute.xlu0 %1276
      %1278 = vrot.lane.b32.xlu0 %v635, 32
      %v1279 = vpop.permute.xlu0 %1278
      %1280 = vrot.lane.b32.xlu0 %v638, 32
      %v1281 = vpop.permute.xlu0 %1280
      %1282 = vrot.lane.b32.xlu0 %v640, 32
      %v1283 = vpop.permute.xlu0 %1282
      %1284 = vrot.lane.b32.xlu0 %v643, 32
      %v1285 = vpop.permute.xlu0 %1284
      %1286 = vrot.lane.b32.xlu0 %v645, 32
      %v1287 = vpop.permute.xlu0 %1286
      %1288 = vrot.lane.b32.xlu0 %v648, 32
      %v1289 = vpop.permute.xlu0 %1288
      %1290 = vrot.lane.b32.xlu0 %v650, 32
      %v1291 = vpop.permute.xlu0 %1290
      %1292 = vrot.lane.b32.xlu0 %v653, 32
      %v1293 = vpop.permute.xlu0 %1292
      %1294 = vrot.lane.b32.xlu0 %v655, 32
      %v1295 = vpop.permute.xlu0 %1294
      %1296 = vrot.lane.b32.xlu0 %v658, 32
      %v1297 = vpop.permute.xlu0 %1296
      %1298 = vrot.lane.b32.xlu0 %v660, 32
      %v1299 = vpop.permute.xlu0 %1298
      %1300 = vrot.lane.b32.xlu0 %v663, 32
      %v1301 = vpop.permute.xlu0 %1300
      %1302 = vrot.lane.b32.xlu0 %v665, 32
      %v1303 = vpop.permute.xlu0 %1302
      %1304 = vrot.lane.b32.xlu0 %v668, 32
      %v1305 = vpop.permute.xlu0 %1304
      %1306 = vrot.lane.b32.xlu0 %v670, 32
      %v1307 = vpop.permute.xlu0 %1306
      %1308 = vrot.lane.b32.xlu0 %v673, 32
      %v1309 = vpop.permute.xlu0 %1308
      %1310 = vrot.lane.b32.xlu0 %v675, 32
      %v1311 = vpop.permute.xlu0 %1310
      %1312 = vrot.lane.b32.xlu0 %v678, 32
      %v1313 = vpop.permute.xlu0 %1312
      %1314 = vrot.lane.b32.xlu0 %v680, 32
      %v1315 = vpop.permute.xlu0 %1314
      %1316 = vrot.lane.b32.xlu0 %v975, 32
      %v1317 = vpop.permute.xlu0 %1316
      %1318 = vrot.lane.b32.xlu0 %v977, 32
      %v1319 = vpop.permute.xlu0 %1318
      %1320 = vrot.lane.b32.xlu0 %v605, 32
      %v1321 = vpop.permute.xlu0 %1320
      %vm1353 = vcmask 31744
      %v1354 = vsel %vm1353, 0.0, %v511
      %v1355 = vsel %vm1353, %v369, %v513
      %v1356 = vsel %vm1353, %v276, %v515
      %v1357 = vsel %vm1353, %v370, %v517
      %v1358 = vsel %vm1353, %v279, %v519
      %v1359 = vsel %vm1353, %v371, %v521
      %v1360 = vsel %vm1353, %v282, %v523
      %v1361 = vsel %vm1353, %v372, %v525
      %v1362 = vsel %vm1353, %v285, %v527
      %v1363 = vsel %vm1353, %v373, %v529
      %v1364 = vsel %vm1353, %v288, %v531
      %v1365 = vsel %vm1353, %v374, %v533
      %v1366 = vsel %vm1353, %v291, %v535
      %v1367 = vsel %vm1353, %v375, %v537
      %v1368 = vsel %vm1353, %v294, %v539
      %v1369 = vsel %vm1353, %v376, %v541
      %v1370 = vsel %vm1353, %v297, %v543
      %v1371 = vsel %vm1353, %v377, %v545
      %v1372 = vsel %vm1353, %v300, %v547
      %v1373 = vsel %vm1353, %v378, %v549
      %v1374 = vsel %vm1353, %v303, %v551
      %v1375 = vsel %vm1353, %v379, %v553
      %v1376 = vsel %vm1353, %v306, %v555
      %v1377 = vsel %vm1353, %v380, %v557
      %v1378 = vsel %vm1353, %v309, %v559
      %v1379 = vsel %vm1353, %v381, %v561
      %v1380 = vsel %vm1353, %v312, %v563
      %v1381 = vsel %vm1353, %v382, %v565
      %v1382 = vsel %vm1353, %v315, %v567
      %v1383 = vsel %vm1353, %v383, %v569
      %v1384 = vsel %vm1353, %v318, %v571
      %vm1385 = vcmask 64512
      %v1386 = vsel %vm1385, %v1354, %v682
      %v1387 = vsel %vm1385, %v1355, %v684
      %v1388 = vsel %vm1385, %v1356, %v686
      %v1389 = vsel %vm1385, %v1357, %v688
      %v1390 = vsel %vm1385, %v1358, %v690
      %v1391 = vsel %vm1385, %v1359, %v692
      %v1392 = vsel %vm1385, %v1360, %v694
      %v1393 = vsel %vm1385, %v1361, %v696
      %v1394 = vsel %vm1385, %v1362, %v698
      %v1395 = vsel %vm1385, %v1363, %v700
      %v1396 = vsel %vm1385, %v1364, %v702
      %v1397 = vsel %vm1385, %v1365, %v704
      %v1398 = vsel %vm1385, %v1366, %v706
      %v1399 = vsel %vm1385, %v1367, %v708
      %v1400 = vsel %vm1385, %v1368, %v710
      %v1401 = vsel %vm1385, %v1369, %v712
      %v1402 = vsel %vm1385, %v1370, %v714
      %v1403 = vsel %vm1385, %v1371, %v716
      %v1404 = vsel %vm1385, %v1372, %v718
      %v1405 = vsel %vm1385, %v1373, %v720
      %v1406 = vsel %vm1385, %v1374, %v722
      %v1407 = vsel %vm1385, %v1375, %v724
      %v1408 = vsel %vm1385, %v1376, %v726
      %v1409 = vsel %vm1385, %v1377, %v728
      %v1410 = vsel %vm1385, %v1378, %v730
      %v1411 = vsel %vm1385, %v1379, %v732
      %v1412 = vsel %vm1385, %v1380, %v734
      %v1413 = vsel %vm1385, %v1381, %v736
      %v1414 = vsel %vm1385, %v1382, %v738
      %v1415 = vsel %vm1385, %v1383, %v740
      %v1416 = vsel %vm1385, %v1384, %v742
      %vm1417 = vcmask 97280
      %v1418 = vsel %vm1417, %v1386, %v776
      %v1419 = vsel %vm1417, %v1386, %v778
      %v1420 = vsel %vm1417, %v1387, %v780
      %v1421 = vsel %vm1417, %v1388, %v782
      %v1422 = vsel %vm1417, %v1389, %v784
      %v1423 = vsel %vm1417, %v1390, %v786
      %v1424 = vsel %vm1417, %v1391, %v788
      %v1425 = vsel %vm1417, %v1392, %v790
      %v1426 = vsel %vm1417, %v1393, %v792
      %v1427 = vsel %vm1417, %v1394, %v794
      %v1428 = vsel %vm1417, %v1395, %v796
      %v1429 = vsel %vm1417, %v1396, %v798
      %v1430 = vsel %vm1417, %v1397, %v800
      %v1431 = vsel %vm1417, %v1398, %v802
      %v1432 = vsel %vm1417, %v1399, %v804
      %v1433 = vsel %vm1417, %v1400, %v806
      %v1434 = vsel %vm1417, %v1401, %v808
      %v1435 = vsel %vm1417, %v1402, %v810
      %v1436 = vsel %vm1417, %v1403, %v812
      %v1437 = vsel %vm1417, %v1404, %v814
      %v1438 = vsel %vm1417, %v1405, %v816
      %v1439 = vsel %vm1417, %v1406, %v818
      %v1440 = vsel %vm1417, %v1407, %v820
      %v1441 = vsel %vm1417, %v1408, %v822
      %v1442 = vsel %vm1417, %v1409, %v824
      %v1443 = vsel %vm1417, %v1410, %v826
      %v1444 = vsel %vm1417, %v1411, %v828
      %v1445 = vsel %vm1417, %v1412, %v830
      %v1446 = vsel %vm1417, %v1413, %v832
      %v1447 = vsel %vm1417, %v1414, %v834
      %v1448 = vsel %vm1417, %v1415, %v836
      %v1449 = vsel %vm1417, %v1416, %v838
      %vm1450 = vcmask 130048
      %v1451 = vsel %vm1450, %v1418, %v878
      %v1452 = vsel %vm1450, %v1419, %v880
      %v1453 = vsel %vm1450, %v1420, %v882
      %v1454 = vsel %vm1450, %v1421, %v884
      %v1455 = vsel %vm1450, %v1422, %v886
      %v1456 = vsel %vm1450, %v1423, %v888
      %v1457 = vsel %vm1450, %v1424, %v890
      %v1458 = vsel %vm1450, %v1425, %v892
      %v1459 = vsel %vm1450, %v1426, %v894
      %v1460 = vsel %vm1450, %v1427, %v896
      %v1461 = vsel %vm1450, %v1428, %v898
      %v1462 = vsel %vm1450, %v1429, %v900
      %v1463 = vsel %vm1450, %v1430, %v902
      %v1464 = vsel %vm1450, %v1431, %v904
      %v1465 = vsel %vm1450, %v1432, %v906
      %v1466 = vsel %vm1450, %v1433, %v908
      %v1467 = vsel %vm1450, %v1434, %v910
      %v1468 = vsel %vm1450, %v1435, %v912
      %v1469 = vsel %vm1450, %v1436, %v914
      %v1470 = vsel %vm1450, %v1437, %v916
      %v1471 = vsel %vm1450, %v1438, %v918
      %v1472 = vsel %vm1450, %v1439, %v920
      %v1473 = vsel %vm1450, %v1440, %v922
      %v1474 = vsel %vm1450, %v1441, %v924
      %v1475 = vsel %vm1450, %v1442, %v926
      %v1476 = vsel %vm1450, %v1443, %v928
      %v1477 = vsel %vm1450, %v1444, %v930
      %v1478 = vsel %vm1450, %v1445, %v932
      %v1479 = vsel %vm1450, %v1446, %v934
      %v1480 = vsel %vm1450, %v1447, %v936
      %v1481 = vsel %vm1450, %v1448, %v938
      %v1482 = vsel %vm1450, %v1449, %v940
      %vm1483 = vcmask 162816
      %v1484 = vsel %vm1483, %v1451, %v979
      %v1485 = vsel %vm1483, %v1452, %v981
      %v1486 = vsel %vm1483, %v1453, %v983
      %v1487 = vsel %vm1483, %v1454, %v985
      %v1488 = vsel %vm1483, %v1455, %v987
      %v1489 = vsel %vm1483, %v1456, %v989
      %v1490 = vsel %vm1483, %v1457, %v991
      %v1491 = vsel %vm1483, %v1458, %v993
      %v1492 = vsel %vm1483, %v1459, %v995
      %v1493 = vsel %vm1483, %v1460, %v997
      %v1494 = vsel %vm1483, %v1461, %v999
      %v1495 = vsel %vm1483, %v1462, %v1001
      %v1496 = vsel %vm1483, %v1463, %v1003
      %v1497 = vsel %vm1483, %v1464, %v1005
      %v1498 = vsel %vm1483, %v1465, %v1007
      %v1499 = vsel %vm1483, %v1466, %v1009
      %v1500 = vsel %vm1483, %v1467, %v1011
      %v1501 = vsel %vm1483, %v1468, %v1013
      %v1502 = vsel %vm1483, %v1469, %v1015
      %v1503 = vsel %vm1483, %v1470, %v1017
      %v1504 = vsel %vm1483, %v1471, %v1019
      %v1505 = vsel %vm1483, %v1472, %v1021
      %v1506 = vsel %vm1483, %v1473, %v1023
      %v1507 = vsel %vm1483, %v1474, %v1025
      %v1508 = vsel %vm1483, %v1475, %v1027
      %v1509 = vsel %vm1483, %v1476, %v1029
      %v1510 = vsel %vm1483, %v1477, %v1031
      %v1511 = vsel %vm1483, %v1478, %v1033
      %v1512 = vsel %vm1483, %v1479, %v1035
      %v1513 = vsel %vm1483, %v1480, %v1037
      %v1514 = vsel %vm1483, %v1481, %v1039
      %v1515 = vsel %vm1483, %v1482, %v1041
      %vm1516 = vcmask 195584
      %v1517 = vsel %vm1516, %v1484, %v1075
      %v1518 = vsel %vm1516, %v1485, %v1077
      %v1519 = vsel %vm1516, %v1486, %v1079
      %v1520 = vsel %vm1516, %v1487, %v1081
      %v1521 = vsel %vm1516, %v1488, %v1083
      %v1522 = vsel %vm1516, %v1489, %v1085
      %v1523 = vsel %vm1516, %v1490, %v1087
      %v1524 = vsel %vm1516, %v1491, %v1089
      %v1525 = vsel %vm1516, %v1492, %v1091
      %v1526 = vsel %vm1516, %v1493, %v1093
      %v1527 = vsel %vm1516, %v1494, %v1095
      %v1528 = vsel %vm1516, %v1495, %v1097
      %v1529 = vsel %vm1516, %v1496, %v1099
      %v1530 = vsel %vm1516, %v1497, %v1101
      %v1531 = vsel %vm1516, %v1498, %v1103
      %v1532 = vsel %vm1516, %v1499, %v1105
      %v1533 = vsel %vm1516, %v1500, %v1107
      %v1534 = vsel %vm1516, %v1501, %v1109
      %v1535 = vsel %vm1516, %v1502, %v1111
      %v1536 = vsel %vm1516, %v1503, %v1113
      %v1537 = vsel %vm1516, %v1504, %v1115
      %v1538 = vsel %vm1516, %v1505, %v1117
      %v1539 = vsel %vm1516, %v1506, %v1119
      %v1540 = vsel %vm1516, %v1507, %v1121
      %v1541 = vsel %vm1516, %v1508, %v1123
      %v1542 = vsel %vm1516, %v1509, %v1125
      %v1543 = vsel %vm1516, %v1510, %v1127
      %v1544 = vsel %vm1516, %v1511, %v1129
      %v1545 = vsel %vm1516, %v1512, %v1131
      %v1546 = vsel %vm1516, %v1513, %v1133
      %v1547 = vsel %vm1516, %v1514, %v1135
      %v1548 = vsel %vm1516, %v1515, %v1135
      %vm1549 = vcmask 228352
      %v1550 = vsel %vm1549, %v1517, %v1168
      %v1551 = vsel %vm1549, %v1518, %v1170
      %v1552 = vsel %vm1549, %v1519, %v1172
      %v1553 = vsel %vm1549, %v1520, %v1174
      %v1554 = vsel %vm1549, %v1521, %v1176
      %v1555 = vsel %vm1549, %v1522, %v1178
      %v1556 = vsel %vm1549, %v1523, %v1180
      %v1557 = vsel %vm1549, %v1524, %v1182
      %v1558 = vsel %vm1549, %v1525, %v1184
      %v1559 = vsel %vm1549, %v1526, %v1186
      %v1560 = vsel %vm1549, %v1527, %v1188
      %v1561 = vsel %vm1549, %v1528, %v1190
      %v1562 = vsel %vm1549, %v1529, %v1192
      %v1563 = vsel %vm1549, %v1530, %v1194
      %v1564 = vsel %vm1549, %v1531, %v1196
      %v1565 = vsel %vm1549, %v1532, %v1198
      %v1566 = vsel %vm1549, %v1533, %v1200
      %v1567 = vsel %vm1549, %v1534, %v1202
      %v1568 = vsel %vm1549, %v1535, %v1204
      %v1569 = vsel %vm1549, %v1536, %v1206
      %v1570 = vsel %vm1549, %v1537, %v1208
      %v1571 = vsel %vm1549, %v1538, %v1210
      %v1572 = vsel %vm1549, %v1539, %v1212
      %v1573 = vsel %vm1549, %v1540, %v1214
      %v1574 = vsel %vm1549, %v1541, %v1216
      %v1575 = vsel %vm1549, %v1542, %v1218
      %v1576 = vsel %vm1549, %v1543, %v1220
      %v1577 = vsel %vm1549, %v1544, %v1222
      %v1578 = vsel %vm1549, %v1545, %v1224
      %v1579 = vsel %vm1549, %v1546, %v1226
      %v1580 = vsel %vm1549, %v1547, %v1228
      %v1581 = vsel %vm1549, %v1548, %v1228
      %vm1582 = vcmask 261120
      %v1583 = vsel %vm1582, %v1550, %v1261
      %v1584 = vsel %vm1582, %v1551, %v1263
      %v1585 = vsel %vm1582, %v1552, %v1265
      %v1586 = vsel %vm1582, %v1553, %v1267
      %v1587 = vsel %vm1582, %v1554, %v1269
      %v1588 = vsel %vm1582, %v1555, %v1271
      %v1589 = vsel %vm1582, %v1556, %v1273
      %v1590 = vsel %vm1582, %v1557, %v1275
      %v1591 = vsel %vm1582, %v1558, %v1277
      %v1592 = vsel %vm1582, %v1559, %v1279
      %v1593 = vsel %vm1582, %v1560, %v1281
      %v1594 = vsel %vm1582, %v1561, %v1283
      %v1595 = vsel %vm1582, %v1562, %v1285
      %v1596 = vsel %vm1582, %v1563, %v1287
      %v1597 = vsel %vm1582, %v1564, %v1289
      %v1598 = vsel %vm1582, %v1565, %v1291
      %v1599 = vsel %vm1582, %v1566, %v1293
      %v1600 = vsel %vm1582, %v1567, %v1295
      %v1601 = vsel %vm1582, %v1568, %v1297
      %v1602 = vsel %vm1582, %v1569, %v1299
      %v1603 = vsel %vm1582, %v1570, %v1301
      %v1604 = vsel %vm1582, %v1571, %v1303
      %v1605 = vsel %vm1582, %v1572, %v1305
      %v1606 = vsel %vm1582, %v1573, %v1307
      %v1607 = vsel %vm1582, %v1574, %v1309
      %v1608 = vsel %vm1582, %v1575, %v1311
      %v1609 = vsel %vm1582, %v1576, %v1313
      %v1610 = vsel %vm1582, %v1577, %v1315
      %v1611 = vsel %vm1582, %v1578, %v1317
      %v1612 = vsel %vm1582, %v1579, %v1319
      %v1613 = vsel %vm1582, %v1580, %v1321
      %v1614 = vsel %vm1582, %v1581, %v1321
      %v1615 = vld [vmem:[%s1] sm:$0xff]
      %v1616 = vld [vmem:[%s1 + $0x8] sm:$0xff]
      %v1617 = vld [vmem:[%s1 + $0x10] sm:$0xff]
      %v1618 = vld [vmem:[%s1 + $0x18] sm:$0xff]
      %v1619 = vld [vmem:[%s1 + $0x20] sm:$0xf]
      %v1620 = vld [vmem:[%s2] sm:$0x1]
      %v1622 = vlaneseq
      %v1623 = vshrl.u32 %v1622, 7
      %v1624 = vsub.s32 0, %v1623
      %v1625 = vrot.slane %v1620, %v1624
      %vm1627 = vcmask 293888
      %v1629 = vsel %vm1627, %v1583, 0
      %v1632 = vsel %vm1627, %v1584, 0
      %v1635 = vsel %vm1627, %v1585, 0
      %v1638 = vsel %vm1627, %v1586, 0
      %v1641 = vsel %vm1627, %v1587, 0
      %v1644 = vsel %vm1627, %v1588, 0
      %v1647 = vsel %vm1627, %v1589, 0
      %v1650 = vsel %vm1627, %v1590, 0
      %v1653 = vsel %vm1627, %v1591, 0
      %v1656 = vsel %vm1627, %v1592, 0
      %v1659 = vsel %vm1627, %v1593, 0
      %v1662 = vsel %vm1627, %v1594, 0
      %v1665 = vsel %vm1627, %v1595, 0
      %v1668 = vsel %vm1627, %v1596, 0
      %v1671 = vsel %vm1627, %v1597, 0
      %v1674 = vsel %vm1627, %v1598, 0
      %v1677 = vsel %vm1627, %v1599, 0
      %v1680 = vsel %vm1627, %v1600, 0
      %v1683 = vsel %vm1627, %v1601, 0
      %v1686 = vsel %vm1627, %v1602, 0
      %v1689 = vsel %vm1627, %v1603, 0
      %v1692 = vsel %vm1627, %v1604, 0
      %v1695 = vsel %vm1627, %v1605, 0
      %v1698 = vsel %vm1627, %v1606, 0
      %v1701 = vsel %vm1627, %v1607, 0
      %v1704 = vsel %vm1627, %v1608, 0
      %v1707 = vsel %vm1627, %v1609, 0
      %v1710 = vsel %vm1627, %v1610, 0
      %v1713 = vsel %vm1627, %v1611, 0
      %v1716 = vsel %vm1627, %v1612, 0
      %v1719 = vsel %vm1627, %v1613, 0
      %v1722 = vsel %vm1627, %v1614, 0
      %vm1724 = vcmask 1043456
      %v1726 = vsel %vm1724, %v1619, 0
      %1728 = vmatprep.subr.mxu0 0.0
      %1729 = vmatpush1.msra.mxu0 %v1615
      %1730 = vmatprep.subr.mxu0 0.0
      %1731 = vmatpush1.msra.mxu0 %v1616
      %1732 = vmatprep.subr.mxu0 0.0
      %1733 = vmatpush1.msra.mxu0 %v1617
      %1734 = vmatprep.subr.mxu0 0.0
      %1735 = vmatpush1.msra.mxu0 %v1618
      %1736 = vmatprep.subr.mxu0 0.0
      %1737 = vmatpush1.msra.mxu0 %v1726
      %1738 = vmatprep.subr.mxu0 0.0
      %1739 = vmatpush1.msra.mxu0 0.0
      %1740 = vmatprep.subr.mxu0 0.0
      %1741 = vmatpush1.msra.mxu0 0.0
      %1742 = vmatprep.subr.mxu0 0.0
      %1743 = vmatpush1.msra.mxu0 0.0
      %1744 = vmatprep.subr.mxu0 0.0
      %1745 = vmatpush1.msra.mxu0 0.0
      %1746 = vmatprep.subr.mxu0 0.0
      %1747 = vmatpush1.msra.mxu0 0.0
      %1748 = vmatprep.subr.mxu0 0.0
      %1749 = vmatpush1.msra.mxu0 0.0
      %1750 = vmatprep.subr.mxu0 0.0
      %1751 = vmatpush1.msra.mxu0 0.0
      %1752 = vmatprep.subr.mxu0 0.0
      %1753 = vmatpush1.msra.mxu0 0.0
      %1754 = vmatprep.subr.mxu0 0.0
      %1755 = vmatpush1.msra.mxu0 0.0
      %1756 = vmatprep.subr.mxu0 0.0
      %1757 = vmatpush1.msra.mxu0 0.0
      %1758 = vmatprep.subr.mxu0 0.0
      %1759 = vmatpush1.msra.mxu0 0.0
      %1760 = vmatprep.subr.mxu0 0.0
      %1761 = vmatpush1.msra.mxu0 0.0
      %1762 = vmatprep.subr.mxu0 0.0
      %1763 = vmatpush1.msra.mxu0 0.0
      %1764 = vmatprep.subr.mxu0 0.0
      %1765 = vmatpush1.msra.mxu0 0.0
      %1766 = vmatprep.subr.mxu0 0.0
      %1767 = vmatpush1.msra.mxu0 0.0
      %1768 = vmatprep.subr.mxu0 0.0
      %1769 = vmatpush1.msra.mxu0 0.0
      %1770 = vmatprep.subr.mxu0 0.0
      %1771 = vmatpush1.msra.mxu0 0.0
      %1772 = vmatprep.subr.mxu0 0.0
      %1773 = vmatpush1.msra.mxu0 0.0
      %1774 = vmatprep.subr.mxu0 0.0
      %1775 = vmatpush1.msra.mxu0 0.0
      %1776 = vmatprep.subr.mxu0 0.0
      %1777 = vmatpush1.msra.mxu0 0.0
      %1778 = vmatprep.subr.mxu0 0.0
      %1779 = vmatpush1.msra.mxu0 0.0
      %1780 = vmatprep.subr.mxu0 0.0
      %1781 = vmatpush1.msra.mxu0 0.0
      %1782 = vmatprep.subr.mxu0 0.0
      %1783 = vmatpush1.msra.mxu0 0.0
      %1784 = vmatprep.subr.mxu0 0.0
      %1785 = vmatpush1.msra.mxu0 0.0
      %1786 = vmatprep.subr.mxu0 0.0
      %1787 = vmatpush1.msra.mxu0 0.0
      %1788 = vmatprep.subr.mxu0 0.0
      %1789 = vmatpush1.msra.mxu0 0.0
      %1790 = vmatprep.subr.mxu0 0.0
      %1791 = vmatpush1.msra.mxu0 0.0
      %1792 = vmatprep.mubr.f32.mxu0 0.0
      %1793 = vmatmul.mubr.f32.gmra.mrb[0].mxu0 %v1629
      %v1794 = vpop.f32.mrb[0].mxu0
      %v1795 = vadd.f32 %v1625, %v1794
      %v1796 = vpop.f32.mrb[0].mxu0
      %1797 = vmatprep.mubr.f32.mxu0 0.0
      %1798 = vmatmul.mubr.f32.gmra.mrb[0].mxu0 %v1632
      %v1799 = vpop.f32.mrb[0].mxu0
      %v1800 = vadd.f32 %v1625, %v1799
      %v1801 = vpop.f32.mrb[0].mxu0
      %1802 = vmatprep.mubr.f32.mxu0 0.0
      %1803 = vmatmul.mubr.f32.gmra.mrb[0].mxu0 %v1635
      %v1804 = vpop.f32.mrb[0].mxu0
      %v1805 = vadd.f32 %v1625, %v1804
      %v1806 = vpop.f32.mrb[0].mxu0
      %1807 = vmatprep.mubr.f32.mxu0 0.0
      %1808 = vmatmul.mubr.f32.gmra.mrb[0].mxu0 %v1638
      %v1809 = vpop.f32.mrb[0].mxu0
      %v1810 = vadd.f32 %v1625, %v1809
      %v1811 = vpop.f32.mrb[0].mxu0
      %1812 = vmatprep.mubr.f32.mxu0 0.0
      %1813 = vmatmul.mubr.f32.gmra.mrb[0].mxu0 %v1641
      %v1814 = vpop.f32.mrb[0].mxu0
      %v1815 = vadd.f32 %v1625, %v1814
      %v1816 = vpop.f32.mrb[0].mxu0
      %1817 = vmatprep.mubr.f32.mxu0 0.0
      %1818 = vmatmul.mubr.f32.gmra.mrb[0].mxu0 %v1644
      %v1819 = vpop.f32.mrb[0].mxu0
      %v1820 = vadd.f32 %v1625, %v1819
      %v1821 = vpop.f32.mrb[0].mxu0
      %1822 = vmatprep.mubr.f32.mxu0 0.0
      %1823 = vmatmul.mubr.f32.gmra.mrb[0].mxu0 %v1647
      %v1824 = vpop.f32.mrb[0].mxu0
      %v1825 = vadd.f32 %v1625, %v1824
      %v1826 = vpop.f32.mrb[0].mxu0
      %1827 = vmatprep.mubr.f32.mxu0 0.0
      %1828 = vmatmul.mubr.f32.gmra.mrb[0].mxu0 %v1650
      %v1829 = vpop.f32.mrb[0].mxu0
      %v1830 = vadd.f32 %v1625, %v1829
      %v1831 = vpop.f32.mrb[0].mxu0
      %1832 = vmatprep.mubr.f32.mxu0 0.0
      %1833 = vmatmul.mubr.f32.gmra.mrb[0].mxu0 %v1653
      %v1834 = vpop.f32.mrb[0].mxu0
      %v1835 = vadd.f32 %v1625, %v1834
      %v1836 = vpop.f32.mrb[0].mxu0
      %1837 = vmatprep.mubr.f32.mxu0 0.0
      %1838 = vmatmul.mubr.f32.gmra.mrb[0].mxu0 %v1656
      %v1839 = vpop.f32.mrb[0].mxu0
      %v1840 = vadd.f32 %v1625, %v1839
      %v1841 = vpop.f32.mrb[0].mxu0
      %1842 = vmatprep.mubr.f32.mxu0 0.0
      %1843 = vmatmul.mubr.f32.gmra.mrb[0].mxu0 %v1659
      %v1844 = vpop.f32.mrb[0].mxu0
      %v1845 = vadd.f32 %v1625, %v1844
      %v1846 = vpop.f32.mrb[0].mxu0
      %1847 = vmatprep.mubr.f32.mxu0 0.0
      %1848 = vmatmul.mubr.f32.gmra.mrb[0].mxu0 %v1662
      %v1849 = vpop.f32.mrb[0].mxu0
      %v1850 = vadd.f32 %v1625, %v1849
      %v1851 = vpop.f32.mrb[0].mxu0
      %1852 = vmatprep.mubr.f32.mxu0 0.0
      %1853 = vmatmul.mubr.f32.gmra.mrb[0].mxu0 %v1665
      %v1854 = vpop.f32.mrb[0].mxu0
      %v1855 = vadd.f32 %v1625, %v1854
      %v1856 = vpop.f32.mrb[0].mxu0
      %1857 = vmatprep.mubr.f32.mxu0 0.0
      %1858 = vmatmul.mubr.f32.gmra.mrb[0].mxu0 %v1668
      %v1859 = vpop.f32.mrb[0].mxu0
      %v1860 = vadd.f32 %v1625, %v1859
      %v1861 = vpop.f32.mrb[0].mxu0
      %1862 = vmatprep.mubr.f32.mxu0 0.0
      %1863 = vmatmul.mubr.f32.gmra.mrb[0].mxu0 %v1671
      %v1864 = vpop.f32.mrb[0].mxu0
      %v1865 = vadd.f32 %v1625, %v1864
      %v1866 = vpop.f32.mrb[0].mxu0
      %1867 = vmatprep.mubr.f32.mxu0 0.0
      %1868 = vmatmul.mubr.f32.gmra.mrb[0].mxu0 %v1674
      %v1869 = vpop.f32.mrb[0].mxu0
      %v1870 = vadd.f32 %v1625, %v1869
      %v1871 = vpop.f32.mrb[0].mxu0
      %1872 = vmatprep.mubr.f32.mxu0 0.0
      %1873 = vmatmul.mubr.f32.gmra.mrb[0].mxu0 %v1677
      %v1874 = vpop.f32.mrb[0].mxu0
      %v1875 = vadd.f32 %v1625, %v1874
      %v1876 = vpop.f32.mrb[0].mxu0
      %1877 = vmatprep.mubr.f32.mxu0 0.0
      %1878 = vmatmul.mubr.f32.gmra.mrb[0].mxu0 %v1680
      %v1879 = vpop.f32.mrb[0].mxu0
      %v1880 = vadd.f32 %v1625, %v1879
      %v1881 = vpop.f32.mrb[0].mxu0
      %1882 = vmatprep.mubr.f32.mxu0 0.0
      %1883 = vmatmul.mubr.f32.gmra.mrb[0].mxu0 %v1683
      %v1884 = vpop.f32.mrb[0].mxu0
      %v1885 = vadd.f32 %v1625, %v1884
      %v1886 = vpop.f32.mrb[0].mxu0
      %1887 = vmatprep.mubr.f32.mxu0 0.0
      %1888 = vmatmul.mubr.f32.gmra.mrb[0].mxu0 %v1686
      %v1889 = vpop.f32.mrb[0].mxu0
      %v1890 = vadd.f32 %v1625, %v1889
      %v1891 = vpop.f32.mrb[0].mxu0
      %1892 = vmatprep.mubr.f32.mxu0 0.0
      %1893 = vmatmul.mubr.f32.gmra.mrb[0].mxu0 %v1689
      %v1894 = vpop.f32.mrb[0].mxu0
      %v1895 = vadd.f32 %v1625, %v1894
      %v1896 = vpop.f32.mrb[0].mxu0
      %1897 = vmatprep.mubr.f32.mxu0 0.0
      %1898 = vmatmul.mubr.f32.gmra.mrb[0].mxu0 %v1692
      %v1899 = vpop.f32.mrb[0].mxu0
      %v1900 = vadd.f32 %v1625, %v1899
      %v1901 = vpop.f32.mrb[0].mxu0
      %1902 = vmatprep.mubr.f32.mxu0 0.0
      %1903 = vmatmul.mubr.f32.gmra.mrb[0].mxu0 %v1695
      %v1904 = vpop.f32.mrb[0].mxu0
      %v1905 = vadd.f32 %v1625, %v1904
      %v1906 = vpop.f32.mrb[0].mxu0
      %1907 = vmatprep.mubr.f32.mxu0 0.0
      %1908 = vmatmul.mubr.f32.gmra.mrb[0].mxu0 %v1698
      %v1909 = vpop.f32.mrb[0].mxu0
      %v1910 = vadd.f32 %v1625, %v1909
      %v1911 = vpop.f32.mrb[0].mxu0
      %1912 = vmatprep.mubr.f32.mxu0 0.0
      %1913 = vmatmul.mubr.f32.gmra.mrb[0].mxu0 %v1701
      %v1914 = vpop.f32.mrb[0].mxu0
      %v1915 = vadd.f32 %v1625, %v1914
      %v1916 = vpop.f32.mrb[0].mxu0
      %1917 = vmatprep.mubr.f32.mxu0 0.0
      %1918 = vmatmul.mubr.f32.gmra.mrb[0].mxu0 %v1704
      %v1919 = vpop.f32.mrb[0].mxu0
      %v1920 = vadd.f32 %v1625, %v1919
      %v1921 = vpop.f32.mrb[0].mxu0
      %1922 = vmatprep.mubr.f32.mxu0 0.0
      %1923 = vmatmul.mubr.f32.gmra.mrb[0].mxu0 %v1707
      %v1924 = vpop.f32.mrb[0].mxu0
      %v1925 = vadd.f32 %v1625, %v1924
      %v1926 = vpop.f32.mrb[0].mxu0
      %1927 = vmatprep.mubr.f32.mxu0 0.0
      %1928 = vmatmul.mubr.f32.gmra.mrb[0].mxu0 %v1710
      %v1929 = vpop.f32.mrb[0].mxu0
      %v1930 = vadd.f32 %v1625, %v1929
      %v1931 = vpop.f32.mrb[0].mxu0
      %1932 = vmatprep.mubr.f32.mxu0 0.0
      %1933 = vmatmul.mubr.f32.gmra.mrb[0].mxu0 %v1713
      %v1934 = vpop.f32.mrb[0].mxu0
      %v1935 = vadd.f32 %v1625, %v1934
      %v1936 = vpop.f32.mrb[0].mxu0
      %1937 = vmatprep.mubr.f32.mxu0 0.0
      %1938 = vmatmul.mubr.f32.gmra.mrb[0].mxu0 %v1716
      %v1939 = vpop.f32.mrb[0].mxu0
      %v1940 = vadd.f32 %v1625, %v1939
      %v1941 = vpop.f32.mrb[0].mxu0
      %1942 = vmatprep.mubr.f32.mxu0 0.0
      %1943 = vmatmul.mubr.f32.gmra.mrb[0].mxu0 %v1719
      %v1944 = vpop.f32.mrb[0].mxu0
      %v1945 = vadd.f32 %v1625, %v1944
      %v1946 = vpop.f32.mrb[0].mxu0
      %1947 = vmatprep.mubr.f32.mxu0 0.0
      %1948 = vmatmul.mubr.f32.gmra.mrb[0].mxu0 %v1722
      %v1949 = vpop.f32.mrb[0].mxu0
      %v1950 = vadd.f32 %v1625, %v1949
      %v1951 = vpop.f32.mrb[0].mxu0
      %1952 = vdwg.mxu0
      %v1953 = vsel %vm1385, %v1795, 0.0
      %v1954 = vsel %vm1385, %v1800, 0.0
      %v1955 = vadd.f32 %v1953, %v1954
      %v1956 = vsel %vm1385, %v1805, 0.0
      %v1957 = vadd.f32 %v1955, %v1956
      %v1958 = vsel %vm1385, %v1810, 0.0
      %v1959 = vadd.f32 %v1957, %v1958
      %v1960 = vsel %vm1385, %v1815, 0.0
      %v1961 = vadd.f32 %v1959, %v1960
      %v1962 = vsel %vm1385, %v1820, 0.0
      %v1963 = vadd.f32 %v1961, %v1962
      %v1964 = vsel %vm1385, %v1825, 0.0
      %v1965 = vadd.f32 %v1963, %v1964
      %v1966 = vsel %vm1385, %v1830, 0.0
      %v1967 = vadd.f32 %v1965, %v1966
      %v1968 = vsel %vm1385, %v1835, 0.0
      %v1969 = vadd.f32 %v1967, %v1968
      %v1970 = vsel %vm1385, %v1840, 0.0
      %v1971 = vadd.f32 %v1969, %v1970
      %v1972 = vsel %vm1385, %v1845, 0.0
      %v1973 = vadd.f32 %v1971, %v1972
      %v1974 = vsel %vm1385, %v1850, 0.0
      %v1975 = vadd.f32 %v1973, %v1974
      %v1976 = vsel %vm1385, %v1855, 0.0
      %v1977 = vadd.f32 %v1975, %v1976
      %v1978 = vsel %vm1385, %v1860, 0.0
      %v1979 = vadd.f32 %v1977, %v1978
      %v1980 = vsel %vm1385, %v1865, 0.0
      %v1981 = vadd.f32 %v1979, %v1980
      %v1982 = vsel %vm1385, %v1870, 0.0
      %v1983 = vadd.f32 %v1981, %v1982
      %v1984 = vsel %vm1385, %v1875, 0.0
      %v1985 = vadd.f32 %v1983, %v1984
      %v1986 = vsel %vm1385, %v1880, 0.0
      %v1987 = vadd.f32 %v1985, %v1986
      %v1988 = vsel %vm1385, %v1885, 0.0
      %v1989 = vadd.f32 %v1987, %v1988
      %v1990 = vsel %vm1385, %v1890, 0.0
      %v1991 = vadd.f32 %v1989, %v1990
      %v1992 = vsel %vm1385, %v1895, 0.0
      %v1993 = vadd.f32 %v1991, %v1992
      %v1994 = vsel %vm1385, %v1900, 0.0
      %v1995 = vadd.f32 %v1993, %v1994
      %v1996 = vsel %vm1385, %v1905, 0.0
      %v1997 = vadd.f32 %v1995, %v1996
      %v1998 = vsel %vm1385, %v1910, 0.0
      %v1999 = vadd.f32 %v1997, %v1998
      %v2000 = vsel %vm1385, %v1915, 0.0
      %v2001 = vadd.f32 %v1999, %v2000
      %v2002 = vsel %vm1385, %v1920, 0.0
      %v2003 = vadd.f32 %v2001, %v2002
      %v2004 = vsel %vm1385, %v1925, 0.0
      %v2005 = vadd.f32 %v2003, %v2004
      %v2006 = vsel %vm1385, %v1930, 0.0
      %v2007 = vadd.f32 %v2005, %v2006
      %v2008 = vsel %vm1385, %v1935, 0.0
      %v2009 = vadd.f32 %v2007, %v2008
      %v2010 = vsel %vm1385, %v1940, 0.0
      %v2011 = vadd.f32 %v2009, %v2010
      %v2012 = vsel %vm1385, %v1945, 0.0
      %v2013 = vadd.f32 %v2011, %v2012
      %v2014 = vsel %vm1385, %v1950, 0.0
      %v2015 = vadd.f32 %v2013, %v2014
      %v2016 = vrot.slane %v2015, 4
      %v2017 = vadd.f32 %v2015, %v2016
      %v2018 = vrot.slane %v2017, 2
      %v2019 = vadd.f32 %v2017, %v2018
      %v2020 = vrot.slane %v2019, 1
      %v2021 = vadd.f32 %v2019, %v2020
      %v2022 = vmul.f32 %v1795, %v1795
      %v2023 = vmul.f32 %v1800, %v1800
      %v2024 = vmul.f32 %v1805, %v1805
      %v2025 = vmul.f32 %v1810, %v1810
      %v2026 = vmul.f32 %v1815, %v1815
      %v2027 = vmul.f32 %v1820, %v1820
      %v2028 = vmul.f32 %v1825, %v1825
      %v2029 = vmul.f32 %v1830, %v1830
      %v2030 = vmul.f32 %v1835, %v1835
      %v2031 = vmul.f32 %v1840, %v1840
      %v2032 = vmul.f32 %v1845, %v1845
      %v2033 = vmul.f32 %v1850, %v1850
      %v2034 = vmul.f32 %v1855, %v1855
      %v2035 = vmul.f32 %v1860, %v1860
      %v2036 = vmul.f32 %v1865, %v1865
      %v2037 = vmul.f32 %v1870, %v1870
      %v2038 = vmul.f32 %v1875, %v1875
      %v2039 = vmul.f32 %v1880, %v1880
      %v2040 = vmul.f32 %v1885, %v1885
      %v2041 = vmul.f32 %v1890, %v1890
      %v2042 = vmul.f32 %v1895, %v1895
      %v2043 = vmul.f32 %v1900, %v1900
      %v2044 = vmul.f32 %v1905, %v1905
      %v2045 = vmul.f32 %v1910, %v1910
      %v2046 = vmul.f32 %v1915, %v1915
      %v2047 = vmul.f32 %v1920, %v1920
      %v2048 = vmul.f32 %v1925, %v1925
      %v2049 = vmul.f32 %v1930, %v1930
      %v2050 = vmul.f32 %v1935, %v1935
      %v2051 = vmul.f32 %v1940, %v1940
      %v2052 = vmul.f32 %v1945, %v1945
      %v2053 = vmul.f32 %v1950, %v1950
      %v2054 = vsel %vm1385, %v2022, 0.0
      %v2055 = vsel %vm1385, %v2023, 0.0
      %v2056 = vadd.f32 %v2054, %v2055
      %v2057 = vsel %vm1385, %v2024, 0.0
      %v2058 = vadd.f32 %v2056, %v2057
      %v2059 = vsel %vm1385, %v2025, 0.0
      %v2060 = vadd.f32 %v2058, %v2059
      %v2061 = vsel %vm1385, %v2026, 0.0
      %v2062 = vadd.f32 %v2060, %v2061
      %v2063 = vsel %vm1385, %v2027, 0.0
      %v2064 = vadd.f32 %v2062, %v2063
      %v2065 = vsel %vm1385, %v2028, 0.0
      %v2066 = vadd.f32 %v2064, %v2065
      %v2067 = vsel %vm1385, %v2029, 0.0
      %v2068 = vadd.f32 %v2066, %v2067
      %v2069 = vsel %vm1385, %v2030, 0.0
      %v2070 = vadd.f32 %v2068, %v2069
      %v2071 = vsel %vm1385, %v2031, 0.0
      %v2072 = vadd.f32 %v2070, %v2071
      %v2073 = vsel %vm1385, %v2032, 0.0
      %v2074 = vadd.f32 %v2072, %v2073
      %v2075 = vsel %vm1385, %v2033, 0.0
      %v2076 = vadd.f32 %v2074, %v2075
      %v2077 = vsel %vm1385, %v2034, 0.0
      %v2078 = vadd.f32 %v2076, %v2077
      %v2079 = vsel %vm1385, %v2035, 0.0
      %v2080 = vadd.f32 %v2078, %v2079
      %v2081 = vsel %vm1385, %v2036, 0.0
      %v2082 = vadd.f32 %v2080, %v2081
      %v2083 = vsel %vm1385, %v2037, 0.0
      %v2084 = vadd.f32 %v2082, %v2083
      %v2085 = vsel %vm1385, %v2038, 0.0
      %v2086 = vadd.f32 %v2084, %v2085
      %v2087 = vsel %vm1385, %v2039, 0.0
      %v2088 = vadd.f32 %v2086, %v2087
      %v2089 = vsel %vm1385, %v2040, 0.0
      %v2090 = vadd.f32 %v2088, %v2089
      %v2091 = vsel %vm1385, %v2041, 0.0
      %v2092 = vadd.f32 %v2090, %v2091
      %v2093 = vsel %vm1385, %v2042, 0.0
      %v2094 = vadd.f32 %v2092, %v2093
      %v2095 = vsel %vm1385, %v2043, 0.0
      %v2096 = vadd.f32 %v2094, %v2095
      %v2097 = vsel %vm1385, %v2044, 0.0
      %v2098 = vadd.f32 %v2096, %v2097
      %v2099 = vsel %vm1385, %v2045, 0.0
      %v2100 = vadd.f32 %v2098, %v2099
      %v2101 = vsel %vm1385, %v2046, 0.0
      %v2102 = vadd.f32 %v2100, %v2101
      %v2103 = vsel %vm1385, %v2047, 0.0
      %v2104 = vadd.f32 %v2102, %v2103
      %v2105 = vsel %vm1385, %v2048, 0.0
      %v2106 = vadd.f32 %v2104, %v2105
      %v2107 = vsel %vm1385, %v2049, 0.0
      %v2108 = vadd.f32 %v2106, %v2107
      %v2109 = vsel %vm1385, %v2050, 0.0
      %v2110 = vadd.f32 %v2108, %v2109
      %v2111 = vsel %vm1385, %v2051, 0.0
      %v2112 = vadd.f32 %v2110, %v2111
      %v2113 = vsel %vm1385, %v2052, 0.0
      %v2114 = vadd.f32 %v2112, %v2113
      %v2115 = vsel %vm1385, %v2053, 0.0
      %v2116 = vadd.f32 %v2114, %v2115
      %v2117 = vrot.slane %v2116, 4
      %v2118 = vadd.f32 %v2116, %v2117
      %v2119 = vrot.slane %v2118, 2
      %v2120 = vadd.f32 %v2118, %v2119
      %v2121 = vrot.slane %v2120, 1
      %v2122 = vadd.f32 %v2120, %v2121
      %v2123 = vsel %vm273, %v2021, %v2122
      %vm2124 = vcmask 58368
      %2125 = vst.msk [vmem:[%s208] sm:$0x3] %vm2124, %v2123
      %2126 = vst.msk [vmem:[%s204] sm:$0xff] %vm1385, %v1795
      %2127 = vst.msk [vmem:[%s204 + $0x8] sm:$0xff] %vm1385, %v1800
      %2128 = vst.msk [vmem:[%s204 + $0x10] sm:$0xff] %vm1385, %v1805
      %2129 = vst.msk [vmem:[%s204 + $0x18] sm:$0xff] %vm1385, %v1810
      %2130 = vst.msk [vmem:[%s204 + $0x20] sm:$0xff] %vm1385, %v1815
      %2131 = vst.msk [vmem:[%s204 + $0x28] sm:$0xff] %vm1385, %v1820
      %2132 = vst.msk [vmem:[%s204 + $0x30] sm:$0xff] %vm1385, %v1825
      %2133 = vst.msk [vmem:[%s204 + $0x38] sm:$0xff] %vm1385, %v1830
      %2134 = vst.msk [vmem:[%s204 + $0x40] sm:$0xff] %vm1385, %v1835
      %2135 = vst.msk [vmem:[%s204 + $0x48] sm:$0xff] %vm1385, %v1840
      %2136 = vst.msk [vmem:[%s204 + $0x50] sm:$0xff] %vm1385, %v1845
      %2137 = vst.msk [vmem:[%s204 + $0x58] sm:$0xff] %vm1385, %v1850
      %2138 = vst.msk [vmem:[%s204 + $0x60] sm:$0xff] %vm1385, %v1855
      %2139 = vst.msk [vmem:[%s204 + $0x68] sm:$0xff] %vm1385, %v1860
      %2140 = vst.msk [vmem:[%s204 + $0x70] sm:$0xff] %vm1385, %v1865
      %2141 = vst.msk [vmem:[%s204 + $0x78] sm:$0xff] %vm1385, %v1870
      %2142 = vst.msk [vmem:[%s204 + $0x80] sm:$0xff] %vm1385, %v1875
      %2143 = vst.msk [vmem:[%s204 + $0x88] sm:$0xff] %vm1385, %v1880
      %2144 = vst.msk [vmem:[%s204 + $0x90] sm:$0xff] %vm1385, %v1885
      %2145 = vst.msk [vmem:[%s204 + $0x98] sm:$0xff] %vm1385, %v1890
      %2146 = vst.msk [vmem:[%s204 + $0xa0] sm:$0xff] %vm1385, %v1895
      %2147 = vst.msk [vmem:[%s204 + $0xa8] sm:$0xff] %vm1385, %v1900
      %2148 = vst.msk [vmem:[%s204 + $0xb0] sm:$0xff] %vm1385, %v1905
      %2149 = vst.msk [vmem:[%s204 + $0xb8] sm:$0xff] %vm1385, %v1910
      %2150 = vst.msk [vmem:[%s204 + $0xc0] sm:$0xff] %vm1385, %v1915
      %2151 = vst.msk [vmem:[%s204 + $0xc8] sm:$0xff] %vm1385, %v1920
      %2152 = vst.msk [vmem:[%s204 + $0xd0] sm:$0xff] %vm1385, %v1925
      %2153 = vst.msk [vmem:[%s204 + $0xd8] sm:$0xff] %vm1385, %v1930
      %2154 = vst.msk [vmem:[%s204 + $0xe0] sm:$0xff] %vm1385, %v1935
      %2155 = vst.msk [vmem:[%s204 + $0xe8] sm:$0xff] %vm1385, %v1940
      %2156 = vst.msk [vmem:[%s204 + $0xf0] sm:$0xff] %vm1385, %v1945
      %2157 = vst.msk [vmem:[%s204 + $0xf8] sm:$0xff] %vm1385, %v1950
      %p2158 = scmp.lt.s32.totalorder %s16, 1
      %s2159 = scalar_select %p2158, %s16, 1
      %s2160 = smul.addr %s2159, 32
      %s2161 = smul.addr %s2160, 8
      %s2162 = scalar_lea.vmem %s3, %s2161
      %p2163 = scmp.lt.s32.totalorder %s16, 1
      %s2164 = scalar_select %p2163, %s16, 1
      %s2165 = smul.addr %s2164, 2
      %s2166 = scalar_lea.vmem %s4, %s2165
      // Predicated region
      $region33: #{unetconv2_forward_nhwc.2} parent=31 // pred_check
        %p2167 = pneg %p102
      $region34: #{unetconv2_forward_nhwc.2} parent=31 // pred_check_branch
        %2169 = sbr.rel (%p2167) target = $region36
      $region35: #{unetconv2_forward_nhwc.2} parent=31 // pred_region
        _
      $region36: #{unetconv2_forward_nhwc.2} parent=31 // pred_fallthru
        _
      // Predicated region
      $region37: #{unetconv2_forward_nhwc.2} parent=31 // pred_check
        %p2170 = pneg %p128
      $region38: #{unetconv2_forward_nhwc.2} parent=31 // pred_check_branch
        %2172 = sbr.rel (%p2170) target = $region40
      $region39: #{unetconv2_forward_nhwc.2} parent=31 // pred_region
        _
      $region40: #{unetconv2_forward_nhwc.2} parent=31 // pred_fallthru
        _
    $region32: #{unetconv2_forward_nhwc.2} parent=5 // pred_fallthru
      _
    %p2173 = scmp.le.s32.totalorder 2, %s11
    // Predicated region
    $region41: #{unetconv2_forward_nhwc.2} parent=5 // pred_check
      %p2174 = pneg %p2173
    $region42: #{unetconv2_forward_nhwc.2} parent=5 // pred_check_branch
      %2176 = sbr.rel (%p2174) target = $region44
    $region43: #{unetconv2_forward_nhwc.2} parent=5 // pred_region
      %s2177 = ssub.s32 %s11, 2
      // Predicated region
      $region45: #{unetconv2_forward_nhwc.2} parent=43 // pred_check
        %p2178 = pneg %p108
      $region46: #{unetconv2_forward_nhwc.2} parent=43 // pred_check_branch
        %2180 = sbr.rel (%p2178) target = $region48
      $region47: #{unetconv2_forward_nhwc.2} parent=43 // pred_region
        %p2181 = scmp.lt.s32.totalorder %s17, 1
        %s2182 = scalar_select %p2181, %s17, 1
        %s2183 = smul.addr %s2182, 32
        %s2184 = smul.addr %s2183, 8
        %s2185 = scalar_lea.vmem %s3, %s2184
      $region48: #{unetconv2_forward_nhwc.2} parent=43 // pred_fallthru
        _
      // Predicated region
      $region49: #{unetconv2_forward_nhwc.2} parent=43 // pred_check
        %p2186 = pneg %p134
      $region50: #{unetconv2_forward_nhwc.2} parent=43 // pred_check_branch
        %2188 = sbr.rel (%p2186) target = $region52
      $region51: #{unetconv2_forward_nhwc.2} parent=43 // pred_region
        %p2189 = scmp.lt.s32.totalorder %s17, 1
        %s2190 = scalar_select %p2189, %s17, 1
        %s2191 = smul.addr %s2190, 2
        %s2192 = scalar_lea.vmem %s4, %s2191
      $region52: #{unetconv2_forward_nhwc.2} parent=43 // pred_fallthru
        _
    $region44: #{unetconv2_forward_nhwc.2} parent=5 // pred_fallthru
      _
  $region6: #{unetconv2_forward_nhwc.2} parent=0 // loop_footer
    %s15 = sadd.s32 1, %s11
  $region7: #{unetconv2_forward_nhwc.2} parent=0 // loop_footer_branch
    %10 = sbr.rel target = $region3
  $region8: #{unetconv2_forward_nhwc.2} parent=0 // loop_exit
    _

</llo_original>
